<compile_context>
chip_gen: v7x
topology: tpu7x:2x2x1
jax: 0.10.0
libtpu: 0.0.40
codegen_flags: <defaults>
</compile_context>

<pallas_src>
import functools

import jax
import jax.numpy as jnp
from jax import lax
from jax.experimental import pallas as pl
from jax.experimental.pallas import tpu as pltpu

# ----------------------------- model config ---------------------------------
VOCAB_SIZE = 100
MAX_POS = 16
HIDDEN = 32
NUM_HEADS = 4
HEAD_DIM = HIDDEN // NUM_HEADS
INTERMEDIATE = 64
NUM_LAYERS = 2
NUM_LABELS = 6
LABEL_PAD = 128            # lane-dense classifier output width
BATCH = 2
SEQ = 8
LN_EPS = 1e-12
TABLE_ROWS = 128           # word(100) + pos(16) + type(1) rows, zero padded to 128

_TRANS_B = (((1,), (1,)), ((), ()))   # contract last dim of both operands (q @ k^T)


# ----------------------------- in-kernel helpers ----------------------------
def _layernorm(x, g, b, eps=LN_EPS):
    mu = jnp.mean(x, axis=-1, keepdims=True)
    var = jnp.mean(jnp.square(x - mu), axis=-1, keepdims=True)
    return (x - mu) * lax.rsqrt(var + eps) * g + b


def _gelu(x):
    # tanh-approximate GELU (synthetic backbone; exact erf flavor not required)
    return 0.5 * x * (1.0 + jnp.tanh(0.7978845608028654 * (x + 0.044715 * x * x * x)))


def _bf(x):
    return x.astype(jnp.bfloat16)


def _mm(a_bf16, w_bf16):
    # MXU matmul: bf16 operands, f32 accumulation.
    return jnp.dot(a_bf16, w_bf16, preferred_element_type=jnp.float32)


# ----------------------------- fused forward kernel -------------------------
def fused_forward_kernel(num_layers, num_heads, batch, seq,
                         ids_ref, mask_ref, table_ref,
                         emb_g_ref, emb_b_ref,
                         hmask_ref, blocksum_ref, bcmask_ref, clssel_ref,
                         wq_ref, bq_ref, wk_ref, bk_ref, wv_ref, bv_ref,
                         wo_ref, bo_ref, ln1_g_ref, ln1_b_ref,
                         w1_ref, b1_ref, w2_ref, b2_ref,
                         ln2_g_ref, ln2_b_ref,
                         cls_w_ref, cls_b_ref,
                         o_ref):
    B, S, nh = batch, seq, num_heads
    BS = B * S
    nblk = nh * BS                      # score columns, ordered (head, batch, key_pos)

    # ---- in-kernel embedding gather: one-hot @ table on the MXU -------------
    col = lax.broadcasted_iota(jnp.int32, (BS, TABLE_ROWS), 1)
    row = lax.broadcasted_iota(jnp.int32, (BS, TABLE_ROWS), 0)
    pos = jnp.bitwise_and(row, S - 1)                       # row % S (S is power of 2)
    hit = ((col == ids_ref[...])                            # word embedding row
           | (col == pos + VOCAB_SIZE)                      # position embedding row
           | (col == VOCAB_SIZE + MAX_POS))                 # token-type-0 row
    onehot = jnp.where(hit, 1.0, 0.0).astype(jnp.bfloat16)  # (BS, 128)
    x = _mm(onehot, table_ref[...])                         # word+pos+type, (BS, H) f32
    x = _layernorm(x, emb_g_ref[...], emb_b_ref[...])

    # ---- hoisted attention constants (built once, reused by every layer) ----
    mask_row = mask_ref[...]                                 # (1, BS) f32, 1 = valid key
    mask_cols = jnp.concatenate([mask_row] * nh, axis=1)     # (1, nblk)
    negpad = (1.0 - mask_cols) * (-1e9)                      # additive key-padding mask
    hmask = hmask_ref[...]                                   # (nblk, H) head selector
    bcmask = bcmask_ref[...]                                 # (BS, nblk) batch consistency
    blocksum_bf = blocksum_ref[...]                          # (nblk, nblk) bf16 ones-blocks

    # ---- encoder layers (statically unrolled) --------------------------------
    for l in range(num_layers):
        x_bf = _bf(x)                                        # cast once, reused 3x
        # per-head Q/K/V projections; 1/sqrt(head_dim) is folded into wq at init
        q = _mm(x_bf, wq_ref[l]) + bq_ref[l]                 # (BS, H) f32
        k = _mm(x_bf, wk_ref[l]) + bk_ref[l]
        v = _mm(x_bf, wv_ref[l]) + bv_ref[l]

        # sublane-replicated, head-block-masked K / V: no per-head lane slices
        ksub = _bf(jnp.concatenate([k] * nh, axis=0) * hmask)   # (nblk, H) bf16
        vsub = _bf(jnp.concatenate([v] * nh, axis=0) * hmask)   # (nblk, H) bf16

        # all heads, all batches in ONE MXU call: (BS,H) x (nblk,H)^T -> (BS,nblk)
        s = lax.dot_general(_bf(q), ksub, _TRANS_B,
                            preferred_element_type=jnp.float32)
        s = s + negpad

        # block softmax: per-row global max (shift cancels per block),
        # per-block denominators via one MXU matmul, EUP reciprocal
        m = jnp.max(s, axis=-1, keepdims=True)
        e = jnp.exp(s - m)
        denom = _mm(_bf(e), blocksum_bf)                     # (BS, nblk) block sums
        p = e * pl.reciprocal(denom, approx=True) * bcmask   # zero cross-batch blocks

        # context lands with heads already on lanes: (BS,nblk) @ (nblk,H)
        ctx = _mm(_bf(p), vsub)                              # (BS, H) f32

        attn = _mm(_bf(ctx), wo_ref[l]) + bo_ref[l]
        h1 = _layernorm(x + attn, ln1_g_ref[l], ln1_b_ref[l])

        ff = _gelu(_mm(_bf(h1), w1_ref[l]) + b1_ref[l])
        ff = _mm(_bf(ff), w2_ref[l]) + b2_ref[l]
        x = _layernorm(h1 + ff, ln2_g_ref[l], ln2_b_ref[l])

    # ---- CLS pooling (constant row-selector matmul) -> dropout(id) -> cls ----
    cls = _mm(clssel_ref[...], _bf(x))                       # (B, H) f32
    # dropout (p=0.3) is identity at inference
    logits = _mm(_bf(cls), cls_w_ref[...]) + cls_b_ref[...]  # (B, LABEL_PAD) f32
    # sigmoid with the divide on the EUP slot
    o_ref[...] = pl.reciprocal(1.0 + jnp.exp(-logits), approx=True)


# ----------------------------- pallas_call wrapper ---------------------------
def _vmem():
    return pl.BlockSpec(memory_space=pltpu.MemorySpace.VMEM)


def llm_multilabel_forward(params, input_ids, attention_mask):
    B, S = input_ids.shape
    assert S & (S - 1) == 0, "kernel uses row & (S-1) for the position index"
    ids = input_ids.reshape(B * S, 1).astype(jnp.int32)
    mask_row = attention_mask.reshape(1, B * S).astype(jnp.float32)

    args = (ids, mask_row,
            params['emb_table'], params['emb_ln_g'], params['emb_ln_b'],
            params['hmask'], params['blocksum'], params['bcmask'], params['cls_sel'],
            params['wq'], params['bq'], params['wk'], params['bk'],
            params['wv'], params['bv'], params['wo'], params['bo'],
            params['ln1_g'], params['ln1_b'],
            params['w_ff1'], params['b_ff1'], params['w_ff2'], params['b_ff2'],
            params['ln2_g'], params['ln2_b'],
            params['cls_w'], params['cls_b'])

    kernel = functools.partial(fused_forward_kernel, NUM_LAYERS, NUM_HEADS, B, S)
    probs_padded = pl.pallas_call(
        kernel,
        out_shape=jax.ShapeDtypeStruct((B, LABEL_PAD), jnp.float32),
        in_specs=[_vmem() for _ in args],
        out_specs=_vmem(),
    )(*args)
    # slice the lane-padded logits down to the real label count
    return probs_padded[:, :NUM_LABELS]


# ----------------------------- parameters -----------------------------------
def init_params(key):
    keys = iter(jax.random.split(key, 16))

    def nrm(shape, scale=0.02):
        return scale * jax.random.normal(next(keys), shape, jnp.float32)

    L, H, I = NUM_LAYERS, HIDDEN, INTERMEDIATE
    B, S, nh, dh = BATCH, SEQ, NUM_HEADS, HEAD_DIM
    BS, nblk = B * S, NUM_HEADS * B * S

    # embedding table: [word | pos | token-type-0 | zero pad] stacked along rows
    word = nrm((VOCAB_SIZE, H))
    pos = nrm((MAX_POS, H))
    typ = nrm((2, H))
    table = jnp.zeros((TABLE_ROWS, H), jnp.float32)
    table = table.at[:VOCAB_SIZE].set(word)
    table = table.at[VOCAB_SIZE:VOCAB_SIZE + MAX_POS].set(pos)
    table = table.at[VOCAB_SIZE + MAX_POS].set(typ[0])

    # static attention-layout constants (score column c = (h*B + b)*S + s)
    blk = jnp.arange(nblk)
    h_of_blk = blk // BS                               # head id of each score column
    b_of_blk = (blk // S) % B                          # batch id of each score column
    feat_h = jnp.arange(H) // dh                       # head id of each feature lane
    hmask = (h_of_blk[:, None] == feat_h[None, :]).astype(jnp.float32)        # (nblk, H)
    blocksum = (blk[:, None] // S == blk[None, :] // S).astype(jnp.bfloat16)  # (nblk, nblk)
    row_b = jnp.arange(BS) // S
    bcmask = (row_b[:, None] == b_of_blk[None, :]).astype(jnp.float32)        # (BS, nblk)
    cls_sel = (jnp.arange(BS)[None, :] ==
               (jnp.arange(B) * S)[:, None]).astype(jnp.bfloat16)             # (B, BS)

    scale = 1.0 / float(dh) ** 0.5   # folded into wq (bq is zero, so unaffected)
    cls_w = jnp.zeros((H, LABEL_PAD), jnp.float32).at[:, :NUM_LABELS].set(
        nrm((H, NUM_LABELS)))

    params = {
        'emb_table': table.astype(jnp.bfloat16),
        'emb_ln_g': jnp.ones((1, H), jnp.float32),
        'emb_ln_b': jnp.zeros((1, H), jnp.float32),
        'hmask': hmask, 'blocksum': blocksum, 'bcmask': bcmask, 'cls_sel': cls_sel,
        # encoder layers stacked along a leading layer axis; matmul weights bf16
        'wq': (nrm((L, H, H)) * scale).astype(jnp.bfloat16),
        'bq': jnp.zeros((L, 1, H), jnp.float32),
        'wk': nrm((L, H, H)).astype(jnp.bfloat16),
        'bk': jnp.zeros((L, 1, H), jnp.float32),
        'wv': nrm((L, H, H)).astype(jnp.bfloat16),
        'bv': jnp.zeros((L, 1, H), jnp.float32),
        'wo': nrm((L, H, H)).astype(jnp.bfloat16),
        'bo': jnp.zeros((L, 1, H), jnp.float32),
        'ln1_g': jnp.ones((L, 1, H), jnp.float32),
        'ln1_b': jnp.zeros((L, 1, H), jnp.float32),
        'w_ff1': nrm((L, H, I)).astype(jnp.bfloat16),
        'b_ff1': jnp.zeros((L, 1, I), jnp.float32),
        'w_ff2': nrm((L, I, H)).astype(jnp.bfloat16),
        'b_ff2': jnp.zeros((L, 1, H), jnp.float32),
        'ln2_g': jnp.ones((L, 1, H), jnp.float32),
        'ln2_b': jnp.zeros((L, 1, H), jnp.float32),
        # classifier: columns padded to a full 128-lane output
        'cls_w': cls_w.astype(jnp.bfloat16),
        'cls_b': jnp.zeros((1, LABEL_PAD), jnp.float32),
    }
    return params


# ----------------------------- main ------------------------------------------
if __name__ == "__main__":
    key = jax.random.PRNGKey(0)
    k_ids, k_params = jax.random.split(key)

    input_ids = jax.random.randint(k_ids, (BATCH, SEQ), 0, VOCAB_SIZE, dtype=jnp.int32)
    # batch 0 fully valid, batch 1 has two padding tokens at the end
    attention_mask = jnp.array(
        [[1, 1, 1, 1, 1, 1, 1, 1],
         [1, 1, 1, 1, 1, 1, 0, 0]], dtype=jnp.int32)

    params = init_params(k_params)

    probs = llm_multilabel_forward(params, input_ids, attention_mask)
    probs = jax.block_until_ready(probs)

    assert probs.shape == (BATCH, NUM_LABELS)
    assert bool(jnp.all((probs >= 0.0) & (probs <= 1.0)))
    print("KERNEL_OK")
</pallas_src>

<mosaic_0001>
module attributes {stable_mosaic.version = 11 : i64} {
  func.func @fused_forward_kernel(%arg0: memref<16x1xi32, #tpu.memory_space<vmem>>, %arg1: memref<1x16xf32, #tpu.memory_space<vmem>>, %arg2: memref<128x32xbf16, #tpu.memory_space<vmem>>, %arg3: memref<1x32xf32, #tpu.memory_space<vmem>>, %arg4: memref<1x32xf32, #tpu.memory_space<vmem>>, %arg5: memref<64x32xf32, #tpu.memory_space<vmem>>, %arg6: memref<64x64xbf16, #tpu.memory_space<vmem>>, %arg7: memref<16x64xf32, #tpu.memory_space<vmem>>, %arg8: memref<2x16xbf16, #tpu.memory_space<vmem>>, %arg9: memref<2x32x32xbf16, #tpu.memory_space<vmem>>, %arg10: memref<2x1x32xf32, #tpu.memory_space<vmem>>, %arg11: memref<2x32x32xbf16, #tpu.memory_space<vmem>>, %arg12: memref<2x1x32xf32, #tpu.memory_space<vmem>>, %arg13: memref<2x32x32xbf16, #tpu.memory_space<vmem>>, %arg14: memref<2x1x32xf32, #tpu.memory_space<vmem>>, %arg15: memref<2x32x32xbf16, #tpu.memory_space<vmem>>, %arg16: memref<2x1x32xf32, #tpu.memory_space<vmem>>, %arg17: memref<2x1x32xf32, #tpu.memory_space<vmem>>, %arg18: memref<2x1x32xf32, #tpu.memory_space<vmem>>, %arg19: memref<2x32x64xbf16, #tpu.memory_space<vmem>>, %arg20: memref<2x1x64xf32, #tpu.memory_space<vmem>>, %arg21: memref<2x64x32xbf16, #tpu.memory_space<vmem>>, %arg22: memref<2x1x32xf32, #tpu.memory_space<vmem>>, %arg23: memref<2x1x32xf32, #tpu.memory_space<vmem>>, %arg24: memref<2x1x32xf32, #tpu.memory_space<vmem>>, %arg25: memref<32x128xbf16, #tpu.memory_space<vmem>>, %arg26: memref<1x128xf32, #tpu.memory_space<vmem>>, %arg27: memref<2x128xf32, #tpu.memory_space<vmem>>) attributes {dimension_semantics = [], scalar_prefetch = 0 : i64, scratch_operands = 0 : i64, tpu.core_type = #tpu.core_type<tc>} {
    %0 = tpu.iota {dimensions = array<i32: 1>} : vector<16x128xi32>
    %1 = tpu.iota {dimensions = array<i32: 0>} : vector<16x128xi32>
    %c7_i32 = arith.constant 7 : i32
    %2 = vector.broadcast %c7_i32 : i32 to vector<16x128xi32>
    %3 = arith.andi %1, %2 : vector<16x128xi32>
    %c0 = arith.constant 0 : index
    %c0_0 = arith.constant 0 : index
    %4 = vector.load %arg0[%c0, %c0_0] : memref<16x1xi32, #tpu.memory_space<vmem>>, vector<16x1xi32>
    %5 = vector.broadcast %4 : vector<16x1xi32> to vector<16x128xi32>
    %6 = arith.cmpi eq, %0, %5 : vector<16x128xi32>
    %c100_i32 = arith.constant 100 : i32
    %7 = vector.broadcast %c100_i32 : i32 to vector<16x128xi32>
    %8 = arith.addi %3, %7 : vector<16x128xi32>
    %9 = arith.cmpi eq, %0, %8 : vector<16x128xi32>
    %10 = arith.ori %6, %9 : vector<16x128xi1>
    %c116_i32 = arith.constant 116 : i32
    %11 = vector.broadcast %c116_i32 : i32 to vector<16x128xi32>
    %12 = arith.cmpi eq, %0, %11 : vector<16x128xi32>
    %13 = arith.ori %10, %12 : vector<16x128xi1>
    %cst = arith.constant 1.000000e+00 : f32
    %cst_1 = arith.constant 0.000000e+00 : f32
    %14 = vector.broadcast %cst : f32 to vector<16x128xf32>
    %15 = vector.broadcast %cst_1 : f32 to vector<16x128xf32>
    %16 = arith.select %13, %14, %15 : vector<16x128xi1>, vector<16x128xf32>
    %17 = arith.truncf %16 : vector<16x128xf32> to vector<16x128xbf16>
    %c0_2 = arith.constant 0 : index
    %c0_3 = arith.constant 0 : index
    %18 = vector.load %arg2[%c0_2, %c0_3] : memref<128x32xbf16, #tpu.memory_space<vmem>>, vector<128x32xbf16>
    %cst_4 = arith.constant dense<0.000000e+00> : vector<16x32xf32>
    %19 = tpu.matmul %17, %18, %cst_4 {dimension_numbers = #tpu.dot_dimension_numbers<[1], [0], [0], [1], [0, 0, 1, 1], [], []>} : vector<16x128xbf16>, vector<128x32xbf16>, vector<16x32xf32> -> vector<16x32xf32>
    %c0_5 = arith.constant 0 : index
    %c0_6 = arith.constant 0 : index
    %20 = vector.load %arg3[%c0_5, %c0_6] : memref<1x32xf32, #tpu.memory_space<vmem>>, vector<1x32xf32>
    %c0_7 = arith.constant 0 : index
    %c0_8 = arith.constant 0 : index
    %21 = vector.load %arg4[%c0_7, %c0_8] : memref<1x32xf32, #tpu.memory_space<vmem>>, vector<1x32xf32>
    %cst_9 = arith.constant dense<0.000000e+00> : vector<16xf32>
    %22 = vector.multi_reduction <add>, %19, %cst_9 [1] : vector<16x32xf32> to vector<16xf32>
    %23 = vector.shape_cast %22 : vector<16xf32> to vector<16x1xf32>
    %cst_10 = arith.constant 3.200000e+01 : f32
    %24 = vector.broadcast %cst_10 : f32 to vector<16x1xf32>
    %25 = arith.divf %23, %24 : vector<16x1xf32>
    %26 = vector.broadcast %25 : vector<16x1xf32> to vector<16x32xf32>
    %27 = arith.subf %19, %26 : vector<16x32xf32>
    %28 = arith.mulf %27, %27 : vector<16x32xf32>
    %cst_11 = arith.constant dense<0.000000e+00> : vector<16xf32>
    %29 = vector.multi_reduction <add>, %28, %cst_11 [1] : vector<16x32xf32> to vector<16xf32>
    %30 = vector.shape_cast %29 : vector<16xf32> to vector<16x1xf32>
    %cst_12 = arith.constant 3.200000e+01 : f32
    %31 = vector.broadcast %cst_12 : f32 to vector<16x1xf32>
    %32 = arith.divf %30, %31 : vector<16x1xf32>
    %33 = vector.broadcast %25 : vector<16x1xf32> to vector<16x32xf32>
    %34 = arith.subf %19, %33 : vector<16x32xf32>
    %cst_13 = arith.constant 9.99999996E-13 : f32
    %35 = vector.broadcast %cst_13 : f32 to vector<16x1xf32>
    %36 = arith.addf %32, %35 : vector<16x1xf32>
    %37 = math.rsqrt %36 : vector<16x1xf32>
    %38 = vector.broadcast %37 : vector<16x1xf32> to vector<16x32xf32>
    %39 = arith.mulf %34, %38 : vector<16x32xf32>
    %40 = vector.broadcast %20 : vector<1x32xf32> to vector<16x32xf32>
    %41 = arith.mulf %39, %40 : vector<16x32xf32>
    %42 = vector.broadcast %21 : vector<1x32xf32> to vector<16x32xf32>
    %43 = arith.addf %41, %42 : vector<16x32xf32>
    %c0_14 = arith.constant 0 : index
    %c0_15 = arith.constant 0 : index
    %44 = vector.load %arg1[%c0_14, %c0_15] : memref<1x16xf32, #tpu.memory_space<vmem>>, vector<1x16xf32>
    %45 = tpu.concatenate %44, %44, %44, %44 in 1 : vector<1x16xf32>, vector<1x16xf32>, vector<1x16xf32>, vector<1x16xf32> -> vector<1x64xf32>
    %cst_16 = arith.constant 1.000000e+00 : f32
    %46 = vector.broadcast %cst_16 : f32 to vector<1x64xf32>
    %47 = arith.subf %46, %45 : vector<1x64xf32>
    %cst_17 = arith.constant -1.000000e+09 : f32
    %48 = vector.broadcast %cst_17 : f32 to vector<1x64xf32>
    %49 = arith.mulf %47, %48 : vector<1x64xf32>
    %c0_18 = arith.constant 0 : index
    %c0_19 = arith.constant 0 : index
    %50 = vector.load %arg5[%c0_18, %c0_19] : memref<64x32xf32, #tpu.memory_space<vmem>>, vector<64x32xf32>
    %c0_20 = arith.constant 0 : index
    %c0_21 = arith.constant 0 : index
    %51 = vector.load %arg7[%c0_20, %c0_21] : memref<16x64xf32, #tpu.memory_space<vmem>>, vector<16x64xf32>
    %c0_22 = arith.constant 0 : index
    %c0_23 = arith.constant 0 : index
    %52 = vector.load %arg6[%c0_22, %c0_23] : memref<64x64xbf16, #tpu.memory_space<vmem>>, vector<64x64xbf16>
    %53 = arith.truncf %43 : vector<16x32xf32> to vector<16x32xbf16>
    %c0_24 = arith.constant 0 : index
    %c0_25 = arith.constant 0 : index
    %c0_26 = arith.constant 0 : index
    %54 = vector.load %arg9[%c0_24, %c0_25, %c0_26] : memref<2x32x32xbf16, #tpu.memory_space<vmem>>, vector<1x32x32xbf16>
    %55 = vector.shape_cast %54 : vector<1x32x32xbf16> to vector<32x32xbf16>
    %cst_27 = arith.constant dense<0.000000e+00> : vector<16x32xf32>
    %56 = tpu.matmul %53, %55, %cst_27 {dimension_numbers = #tpu.dot_dimension_numbers<[1], [0], [0], [1], [0, 0, 1, 1], [], []>} : vector<16x32xbf16>, vector<32x32xbf16>, vector<16x32xf32> -> vector<16x32xf32>
    %c0_28 = arith.constant 0 : index
    %c0_29 = arith.constant 0 : index
    %c0_30 = arith.constant 0 : index
    %57 = vector.load %arg10[%c0_28, %c0_29, %c0_30] : memref<2x1x32xf32, #tpu.memory_space<vmem>>, vector<1x1x32xf32>
    %58 = vector.shape_cast %57 : vector<1x1x32xf32> to vector<1x32xf32>
    %59 = vector.broadcast %58 : vector<1x32xf32> to vector<16x32xf32>
    %60 = arith.addf %56, %59 : vector<16x32xf32>
    %c0_31 = arith.constant 0 : index
    %c0_32 = arith.constant 0 : index
    %c0_33 = arith.constant 0 : index
    %61 = vector.load %arg11[%c0_31, %c0_32, %c0_33] : memref<2x32x32xbf16, #tpu.memory_space<vmem>>, vector<1x32x32xbf16>
    %62 = vector.shape_cast %61 : vector<1x32x32xbf16> to vector<32x32xbf16>
    %cst_34 = arith.constant dense<0.000000e+00> : vector<16x32xf32>
    %63 = tpu.matmul %53, %62, %cst_34 {dimension_numbers = #tpu.dot_dimension_numbers<[1], [0], [0], [1], [0, 0, 1, 1], [], []>} : vector<16x32xbf16>, vector<32x32xbf16>, vector<16x32xf32> -> vector<16x32xf32>
    %c0_35 = arith.constant 0 : index
    %c0_36 = arith.constant 0 : index
    %c0_37 = arith.constant 0 : index
    %64 = vector.load %arg12[%c0_35, %c0_36, %c0_37] : memref<2x1x32xf32, #tpu.memory_space<vmem>>, vector<1x1x32xf32>
    %65 = vector.shape_cast %64 : vector<1x1x32xf32> to vector<1x32xf32>
    %66 = vector.broadcast %65 : vector<1x32xf32> to vector<16x32xf32>
    %67 = arith.addf %63, %66 : vector<16x32xf32>
    %c0_38 = arith.constant 0 : index
    %c0_39 = arith.constant 0 : index
    %c0_40 = arith.constant 0 : index
    %68 = vector.load %arg13[%c0_38, %c0_39, %c0_40] : memref<2x32x32xbf16, #tpu.memory_space<vmem>>, vector<1x32x32xbf16>
    %69 = vector.shape_cast %68 : vector<1x32x32xbf16> to vector<32x32xbf16>
    %cst_41 = arith.constant dense<0.000000e+00> : vector<16x32xf32>
    %70 = tpu.matmul %53, %69, %cst_41 {dimension_numbers = #tpu.dot_dimension_numbers<[1], [0], [0], [1], [0, 0, 1, 1], [], []>} : vector<16x32xbf16>, vector<32x32xbf16>, vector<16x32xf32> -> vector<16x32xf32>
    %c0_42 = arith.constant 0 : index
    %c0_43 = arith.constant 0 : index
    %c0_44 = arith.constant 0 : index
    %71 = vector.load %arg14[%c0_42, %c0_43, %c0_44] : memref<2x1x32xf32, #tpu.memory_space<vmem>>, vector<1x1x32xf32>
    %72 = vector.shape_cast %71 : vector<1x1x32xf32> to vector<1x32xf32>
    %73 = vector.broadcast %72 : vector<1x32xf32> to vector<16x32xf32>
    %74 = arith.addf %70, %73 : vector<16x32xf32>
    %75 = tpu.concatenate %67, %67, %67, %67 in 0 : vector<16x32xf32>, vector<16x32xf32>, vector<16x32xf32>, vector<16x32xf32> -> vector<64x32xf32>
    %76 = arith.mulf %75, %50 : vector<64x32xf32>
    %77 = arith.truncf %76 : vector<64x32xf32> to vector<64x32xbf16>
    %78 = tpu.concatenate %74, %74, %74, %74 in 0 : vector<16x32xf32>, vector<16x32xf32>, vector<16x32xf32>, vector<16x32xf32> -> vector<64x32xf32>
    %79 = arith.mulf %78, %50 : vector<64x32xf32>
    %80 = arith.truncf %79 : vector<64x32xf32> to vector<64x32xbf16>
    %81 = arith.truncf %60 : vector<16x32xf32> to vector<16x32xbf16>
    %cst_45 = arith.constant dense<0.000000e+00> : vector<16x64xf32>
    %82 = tpu.matmul %81, %77, %cst_45 {dimension_numbers = #tpu.dot_dimension_numbers<[1], [1], [0], [0], [0, 0, 1, 0], [], []>} : vector<16x32xbf16>, vector<64x32xbf16>, vector<16x64xf32> -> vector<16x64xf32>
    %83 = vector.broadcast %49 : vector<1x64xf32> to vector<16x64xf32>
    %84 = arith.addf %82, %83 : vector<16x64xf32>
    %cst_46 = arith.constant dense<0xFF800000> : vector<16xf32>
    %85 = vector.multi_reduction <maximumf>, %84, %cst_46 [1] : vector<16x64xf32> to vector<16xf32>
    %86 = vector.shape_cast %85 : vector<16xf32> to vector<16x1xf32>
    %87 = vector.broadcast %86 : vector<16x1xf32> to vector<16x64xf32>
    %88 = arith.subf %84, %87 : vector<16x64xf32>
    %89 = math.exp %88 : vector<16x64xf32>
    %90 = arith.truncf %89 : vector<16x64xf32> to vector<16x64xbf16>
    %cst_47 = arith.constant dense<0.000000e+00> : vector<16x64xf32>
    %91 = tpu.matmul %90, %52, %cst_47 {dimension_numbers = #tpu.dot_dimension_numbers<[1], [0], [0], [1], [0, 0, 1, 1], [], []>} : vector<16x64xbf16>, vector<64x64xbf16>, vector<16x64xf32> -> vector<16x64xf32>
    %92 = tpu.reciprocal %91 {approx = true} : vector<16x64xf32> -> vector<16x64xf32>
    %93 = arith.mulf %89, %92 : vector<16x64xf32>
    %94 = arith.mulf %93, %51 : vector<16x64xf32>
    %95 = arith.truncf %94 : vector<16x64xf32> to vector<16x64xbf16>
    %cst_48 = arith.constant dense<0.000000e+00> : vector<16x32xf32>
    %96 = tpu.matmul %95, %80, %cst_48 {dimension_numbers = #tpu.dot_dimension_numbers<[1], [0], [0], [1], [0, 0, 1, 1], [], []>} : vector<16x64xbf16>, vector<64x32xbf16>, vector<16x32xf32> -> vector<16x32xf32>
    %97 = arith.truncf %96 : vector<16x32xf32> to vector<16x32xbf16>
    %c0_49 = arith.constant 0 : index
    %c0_50 = arith.constant 0 : index
    %c0_51 = arith.constant 0 : index
    %98 = vector.load %arg15[%c0_49, %c0_50, %c0_51] : memref<2x32x32xbf16, #tpu.memory_space<vmem>>, vector<1x32x32xbf16>
    %99 = vector.shape_cast %98 : vector<1x32x32xbf16> to vector<32x32xbf16>
    %cst_52 = arith.constant dense<0.000000e+00> : vector<16x32xf32>
    %100 = tpu.matmul %97, %99, %cst_52 {dimension_numbers = #tpu.dot_dimension_numbers<[1], [0], [0], [1], [0, 0, 1, 1], [], []>} : vector<16x32xbf16>, vector<32x32xbf16>, vector<16x32xf32> -> vector<16x32xf32>
    %c0_53 = arith.constant 0 : index
    %c0_54 = arith.constant 0 : index
    %c0_55 = arith.constant 0 : index
    %101 = vector.load %arg16[%c0_53, %c0_54, %c0_55] : memref<2x1x32xf32, #tpu.memory_space<vmem>>, vector<1x1x32xf32>
    %102 = vector.shape_cast %101 : vector<1x1x32xf32> to vector<1x32xf32>
    %103 = vector.broadcast %102 : vector<1x32xf32> to vector<16x32xf32>
    %104 = arith.addf %100, %103 : vector<16x32xf32>
    %105 = arith.addf %43, %104 : vector<16x32xf32>
    %c0_56 = arith.constant 0 : index
    %c0_57 = arith.constant 0 : index
    %c0_58 = arith.constant 0 : index
    %106 = vector.load %arg17[%c0_56, %c0_57, %c0_58] : memref<2x1x32xf32, #tpu.memory_space<vmem>>, vector<1x1x32xf32>
    %107 = vector.shape_cast %106 : vector<1x1x32xf32> to vector<1x32xf32>
    %c0_59 = arith.constant 0 : index
    %c0_60 = arith.constant 0 : index
    %c0_61 = arith.constant 0 : index
    %108 = vector.load %arg18[%c0_59, %c0_60, %c0_61] : memref<2x1x32xf32, #tpu.memory_space<vmem>>, vector<1x1x32xf32>
    %109 = vector.shape_cast %108 : vector<1x1x32xf32> to vector<1x32xf32>
    %cst_62 = arith.constant dense<0.000000e+00> : vector<16xf32>
    %110 = vector.multi_reduction <add>, %105, %cst_62 [1] : vector<16x32xf32> to vector<16xf32>
    %111 = vector.shape_cast %110 : vector<16xf32> to vector<16x1xf32>
    %cst_63 = arith.constant 3.200000e+01 : f32
    %112 = vector.broadcast %cst_63 : f32 to vector<16x1xf32>
    %113 = arith.divf %111, %112 : vector<16x1xf32>
    %114 = vector.broadcast %113 : vector<16x1xf32> to vector<16x32xf32>
    %115 = arith.subf %105, %114 : vector<16x32xf32>
    %116 = arith.mulf %115, %115 : vector<16x32xf32>
    %cst_64 = arith.constant dense<0.000000e+00> : vector<16xf32>
    %117 = vector.multi_reduction <add>, %116, %cst_64 [1] : vector<16x32xf32> to vector<16xf32>
    %118 = vector.shape_cast %117 : vector<16xf32> to vector<16x1xf32>
    %cst_65 = arith.constant 3.200000e+01 : f32
    %119 = vector.broadcast %cst_65 : f32 to vector<16x1xf32>
    %120 = arith.divf %118, %119 : vector<16x1xf32>
    %121 = vector.broadcast %113 : vector<16x1xf32> to vector<16x32xf32>
    %122 = arith.subf %105, %121 : vector<16x32xf32>
    %cst_66 = arith.constant 9.99999996E-13 : f32
    %123 = vector.broadcast %cst_66 : f32 to vector<16x1xf32>
    %124 = arith.addf %120, %123 : vector<16x1xf32>
    %125 = math.rsqrt %124 : vector<16x1xf32>
    %126 = vector.broadcast %125 : vector<16x1xf32> to vector<16x32xf32>
    %127 = arith.mulf %122, %126 : vector<16x32xf32>
    %128 = vector.broadcast %107 : vector<1x32xf32> to vector<16x32xf32>
    %129 = arith.mulf %127, %128 : vector<16x32xf32>
    %130 = vector.broadcast %109 : vector<1x32xf32> to vector<16x32xf32>
    %131 = arith.addf %129, %130 : vector<16x32xf32>
    %132 = arith.truncf %131 : vector<16x32xf32> to vector<16x32xbf16>
    %c0_67 = arith.constant 0 : index
    %c0_68 = arith.constant 0 : index
    %c0_69 = arith.constant 0 : index
    %133 = vector.load %arg19[%c0_67, %c0_68, %c0_69] : memref<2x32x64xbf16, #tpu.memory_space<vmem>>, vector<1x32x64xbf16>
    %134 = vector.shape_cast %133 : vector<1x32x64xbf16> to vector<32x64xbf16>
    %cst_70 = arith.constant dense<0.000000e+00> : vector<16x64xf32>
    %135 = tpu.matmul %132, %134, %cst_70 {dimension_numbers = #tpu.dot_dimension_numbers<[1], [0], [0], [1], [0, 0, 1, 1], [], []>} : vector<16x32xbf16>, vector<32x64xbf16>, vector<16x64xf32> -> vector<16x64xf32>
    %c0_71 = arith.constant 0 : index
    %c0_72 = arith.constant 0 : index
    %c0_73 = arith.constant 0 : index
    %136 = vector.load %arg20[%c0_71, %c0_72, %c0_73] : memref<2x1x64xf32, #tpu.memory_space<vmem>>, vector<1x1x64xf32>
    %137 = vector.shape_cast %136 : vector<1x1x64xf32> to vector<1x64xf32>
    %138 = vector.broadcast %137 : vector<1x64xf32> to vector<16x64xf32>
    %139 = arith.addf %135, %138 : vector<16x64xf32>
    %cst_74 = arith.constant 5.000000e-01 : f32
    %140 = vector.broadcast %cst_74 : f32 to vector<16x64xf32>
    %141 = arith.mulf %140, %139 : vector<16x64xf32>
    %cst_75 = arith.constant 4.471500e-02 : f32
    %142 = vector.broadcast %cst_75 : f32 to vector<16x64xf32>
    %143 = arith.mulf %142, %139 : vector<16x64xf32>
    %144 = arith.mulf %143, %139 : vector<16x64xf32>
    %145 = arith.mulf %144, %139 : vector<16x64xf32>
    %146 = arith.addf %139, %145 : vector<16x64xf32>
    %cst_76 = arith.constant 0.797884583 : f32
    %147 = vector.broadcast %cst_76 : f32 to vector<16x64xf32>
    %148 = arith.mulf %147, %146 : vector<16x64xf32>
    %149 = math.tanh %148 : vector<16x64xf32>
    %cst_77 = arith.constant 1.000000e+00 : f32
    %150 = vector.broadcast %cst_77 : f32 to vector<16x64xf32>
    %151 = arith.addf %150, %149 : vector<16x64xf32>
    %152 = arith.mulf %141, %151 : vector<16x64xf32>
    %153 = arith.truncf %152 : vector<16x64xf32> to vector<16x64xbf16>
    %c0_78 = arith.constant 0 : index
    %c0_79 = arith.constant 0 : index
    %c0_80 = arith.constant 0 : index
    %154 = vector.load %arg21[%c0_78, %c0_79, %c0_80] : memref<2x64x32xbf16, #tpu.memory_space<vmem>>, vector<1x64x32xbf16>
    %155 = vector.shape_cast %154 : vector<1x64x32xbf16> to vector<64x32xbf16>
    %cst_81 = arith.constant dense<0.000000e+00> : vector<16x32xf32>
    %156 = tpu.matmul %153, %155, %cst_81 {dimension_numbers = #tpu.dot_dimension_numbers<[1], [0], [0], [1], [0, 0, 1, 1], [], []>} : vector<16x64xbf16>, vector<64x32xbf16>, vector<16x32xf32> -> vector<16x32xf32>
    %c0_82 = arith.constant 0 : index
    %c0_83 = arith.constant 0 : index
    %c0_84 = arith.constant 0 : index
    %157 = vector.load %arg22[%c0_82, %c0_83, %c0_84] : memref<2x1x32xf32, #tpu.memory_space<vmem>>, vector<1x1x32xf32>
    %158 = vector.shape_cast %157 : vector<1x1x32xf32> to vector<1x32xf32>
    %159 = vector.broadcast %158 : vector<1x32xf32> to vector<16x32xf32>
    %160 = arith.addf %156, %159 : vector<16x32xf32>
    %161 = arith.addf %131, %160 : vector<16x32xf32>
    %c0_85 = arith.constant 0 : index
    %c0_86 = arith.constant 0 : index
    %c0_87 = arith.constant 0 : index
    %162 = vector.load %arg23[%c0_85, %c0_86, %c0_87] : memref<2x1x32xf32, #tpu.memory_space<vmem>>, vector<1x1x32xf32>
    %163 = vector.shape_cast %162 : vector<1x1x32xf32> to vector<1x32xf32>
    %c0_88 = arith.constant 0 : index
    %c0_89 = arith.constant 0 : index
    %c0_90 = arith.constant 0 : index
    %164 = vector.load %arg24[%c0_88, %c0_89, %c0_90] : memref<2x1x32xf32, #tpu.memory_space<vmem>>, vector<1x1x32xf32>
    %165 = vector.shape_cast %164 : vector<1x1x32xf32> to vector<1x32xf32>
    %cst_91 = arith.constant dense<0.000000e+00> : vector<16xf32>
    %166 = vector.multi_reduction <add>, %161, %cst_91 [1] : vector<16x32xf32> to vector<16xf32>
    %167 = vector.shape_cast %166 : vector<16xf32> to vector<16x1xf32>
    %cst_92 = arith.constant 3.200000e+01 : f32
    %168 = vector.broadcast %cst_92 : f32 to vector<16x1xf32>
    %169 = arith.divf %167, %168 : vector<16x1xf32>
    %170 = vector.broadcast %169 : vector<16x1xf32> to vector<16x32xf32>
    %171 = arith.subf %161, %170 : vector<16x32xf32>
    %172 = arith.mulf %171, %171 : vector<16x32xf32>
    %cst_93 = arith.constant dense<0.000000e+00> : vector<16xf32>
    %173 = vector.multi_reduction <add>, %172, %cst_93 [1] : vector<16x32xf32> to vector<16xf32>
    %174 = vector.shape_cast %173 : vector<16xf32> to vector<16x1xf32>
    %cst_94 = arith.constant 3.200000e+01 : f32
    %175 = vector.broadcast %cst_94 : f32 to vector<16x1xf32>
    %176 = arith.divf %174, %175 : vector<16x1xf32>
    %177 = vector.broadcast %169 : vector<16x1xf32> to vector<16x32xf32>
    %178 = arith.subf %161, %177 : vector<16x32xf32>
    %cst_95 = arith.constant 9.99999996E-13 : f32
    %179 = vector.broadcast %cst_95 : f32 to vector<16x1xf32>
    %180 = arith.addf %176, %179 : vector<16x1xf32>
    %181 = math.rsqrt %180 : vector<16x1xf32>
    %182 = vector.broadcast %181 : vector<16x1xf32> to vector<16x32xf32>
    %183 = arith.mulf %178, %182 : vector<16x32xf32>
    %184 = vector.broadcast %163 : vector<1x32xf32> to vector<16x32xf32>
    %185 = arith.mulf %183, %184 : vector<16x32xf32>
    %186 = vector.broadcast %165 : vector<1x32xf32> to vector<16x32xf32>
    %187 = arith.addf %185, %186 : vector<16x32xf32>
    %188 = arith.truncf %187 : vector<16x32xf32> to vector<16x32xbf16>
    %c1 = arith.constant 1 : index
    %c0_96 = arith.constant 0 : index
    %c0_97 = arith.constant 0 : index
    %189 = vector.load %arg9[%c1, %c0_96, %c0_97] : memref<2x32x32xbf16, #tpu.memory_space<vmem>>, vector<1x32x32xbf16>
    %190 = vector.shape_cast %189 : vector<1x32x32xbf16> to vector<32x32xbf16>
    %cst_98 = arith.constant dense<0.000000e+00> : vector<16x32xf32>
    %191 = tpu.matmul %188, %190, %cst_98 {dimension_numbers = #tpu.dot_dimension_numbers<[1], [0], [0], [1], [0, 0, 1, 1], [], []>} : vector<16x32xbf16>, vector<32x32xbf16>, vector<16x32xf32> -> vector<16x32xf32>
    %c1_99 = arith.constant 1 : index
    %c0_100 = arith.constant 0 : index
    %c0_101 = arith.constant 0 : index
    %192 = vector.load %arg10[%c1_99, %c0_100, %c0_101] : memref<2x1x32xf32, #tpu.memory_space<vmem>>, vector<1x1x32xf32>
    %193 = vector.shape_cast %192 : vector<1x1x32xf32> to vector<1x32xf32>
    %194 = vector.broadcast %193 : vector<1x32xf32> to vector<16x32xf32>
    %195 = arith.addf %191, %194 : vector<16x32xf32>
    %c1_102 = arith.constant 1 : index
    %c0_103 = arith.constant 0 : index
    %c0_104 = arith.constant 0 : index
    %196 = vector.load %arg11[%c1_102, %c0_103, %c0_104] : memref<2x32x32xbf16, #tpu.memory_space<vmem>>, vector<1x32x32xbf16>
    %197 = vector.shape_cast %196 : vector<1x32x32xbf16> to vector<32x32xbf16>
    %cst_105 = arith.constant dense<0.000000e+00> : vector<16x32xf32>
    %198 = tpu.matmul %188, %197, %cst_105 {dimension_numbers = #tpu.dot_dimension_numbers<[1], [0], [0], [1], [0, 0, 1, 1], [], []>} : vector<16x32xbf16>, vector<32x32xbf16>, vector<16x32xf32> -> vector<16x32xf32>
    %c1_106 = arith.constant 1 : index
    %c0_107 = arith.constant 0 : index
    %c0_108 = arith.constant 0 : index
    %199 = vector.load %arg12[%c1_106, %c0_107, %c0_108] : memref<2x1x32xf32, #tpu.memory_space<vmem>>, vector<1x1x32xf32>
    %200 = vector.shape_cast %199 : vector<1x1x32xf32> to vector<1x32xf32>
    %201 = vector.broadcast %200 : vector<1x32xf32> to vector<16x32xf32>
    %202 = arith.addf %198, %201 : vector<16x32xf32>
    %c1_109 = arith.constant 1 : index
    %c0_110 = arith.constant 0 : index
    %c0_111 = arith.constant 0 : index
    %203 = vector.load %arg13[%c1_109, %c0_110, %c0_111] : memref<2x32x32xbf16, #tpu.memory_space<vmem>>, vector<1x32x32xbf16>
    %204 = vector.shape_cast %203 : vector<1x32x32xbf16> to vector<32x32xbf16>
    %cst_112 = arith.constant dense<0.000000e+00> : vector<16x32xf32>
    %205 = tpu.matmul %188, %204, %cst_112 {dimension_numbers = #tpu.dot_dimension_numbers<[1], [0], [0], [1], [0, 0, 1, 1], [], []>} : vector<16x32xbf16>, vector<32x32xbf16>, vector<16x32xf32> -> vector<16x32xf32>
    %c1_113 = arith.constant 1 : index
    %c0_114 = arith.constant 0 : index
    %c0_115 = arith.constant 0 : index
    %206 = vector.load %arg14[%c1_113, %c0_114, %c0_115] : memref<2x1x32xf32, #tpu.memory_space<vmem>>, vector<1x1x32xf32>
    %207 = vector.shape_cast %206 : vector<1x1x32xf32> to vector<1x32xf32>
    %208 = vector.broadcast %207 : vector<1x32xf32> to vector<16x32xf32>
    %209 = arith.addf %205, %208 : vector<16x32xf32>
    %210 = tpu.concatenate %202, %202, %202, %202 in 0 : vector<16x32xf32>, vector<16x32xf32>, vector<16x32xf32>, vector<16x32xf32> -> vector<64x32xf32>
    %211 = arith.mulf %210, %50 : vector<64x32xf32>
    %212 = arith.truncf %211 : vector<64x32xf32> to vector<64x32xbf16>
    %213 = tpu.concatenate %209, %209, %209, %209 in 0 : vector<16x32xf32>, vector<16x32xf32>, vector<16x32xf32>, vector<16x32xf32> -> vector<64x32xf32>
    %214 = arith.mulf %213, %50 : vector<64x32xf32>
    %215 = arith.truncf %214 : vector<64x32xf32> to vector<64x32xbf16>
    %216 = arith.truncf %195 : vector<16x32xf32> to vector<16x32xbf16>
    %cst_116 = arith.constant dense<0.000000e+00> : vector<16x64xf32>
    %217 = tpu.matmul %216, %212, %cst_116 {dimension_numbers = #tpu.dot_dimension_numbers<[1], [1], [0], [0], [0, 0, 1, 0], [], []>} : vector<16x32xbf16>, vector<64x32xbf16>, vector<16x64xf32> -> vector<16x64xf32>
    %218 = vector.broadcast %49 : vector<1x64xf32> to vector<16x64xf32>
    %219 = arith.addf %217, %218 : vector<16x64xf32>
    %cst_117 = arith.constant dense<0xFF800000> : vector<16xf32>
    %220 = vector.multi_reduction <maximumf>, %219, %cst_117 [1] : vector<16x64xf32> to vector<16xf32>
    %221 = vector.shape_cast %220 : vector<16xf32> to vector<16x1xf32>
    %222 = vector.broadcast %221 : vector<16x1xf32> to vector<16x64xf32>
    %223 = arith.subf %219, %222 : vector<16x64xf32>
    %224 = math.exp %223 : vector<16x64xf32>
    %225 = arith.truncf %224 : vector<16x64xf32> to vector<16x64xbf16>
    %cst_118 = arith.constant dense<0.000000e+00> : vector<16x64xf32>
    %226 = tpu.matmul %225, %52, %cst_118 {dimension_numbers = #tpu.dot_dimension_numbers<[1], [0], [0], [1], [0, 0, 1, 1], [], []>} : vector<16x64xbf16>, vector<64x64xbf16>, vector<16x64xf32> -> vector<16x64xf32>
    %227 = tpu.reciprocal %226 {approx = true} : vector<16x64xf32> -> vector<16x64xf32>
    %228 = arith.mulf %224, %227 : vector<16x64xf32>
    %229 = arith.mulf %228, %51 : vector<16x64xf32>
    %230 = arith.truncf %229 : vector<16x64xf32> to vector<16x64xbf16>
    %cst_119 = arith.constant dense<0.000000e+00> : vector<16x32xf32>
    %231 = tpu.matmul %230, %215, %cst_119 {dimension_numbers = #tpu.dot_dimension_numbers<[1], [0], [0], [1], [0, 0, 1, 1], [], []>} : vector<16x64xbf16>, vector<64x32xbf16>, vector<16x32xf32> -> vector<16x32xf32>
    %232 = arith.truncf %231 : vector<16x32xf32> to vector<16x32xbf16>
    %c1_120 = arith.constant 1 : index
    %c0_121 = arith.constant 0 : index
    %c0_122 = arith.constant 0 : index
    %233 = vector.load %arg15[%c1_120, %c0_121, %c0_122] : memref<2x32x32xbf16, #tpu.memory_space<vmem>>, vector<1x32x32xbf16>
    %234 = vector.shape_cast %233 : vector<1x32x32xbf16> to vector<32x32xbf16>
    %cst_123 = arith.constant dense<0.000000e+00> : vector<16x32xf32>
    %235 = tpu.matmul %232, %234, %cst_123 {dimension_numbers = #tpu.dot_dimension_numbers<[1], [0], [0], [1], [0, 0, 1, 1], [], []>} : vector<16x32xbf16>, vector<32x32xbf16>, vector<16x32xf32> -> vector<16x32xf32>
    %c1_124 = arith.constant 1 : index
    %c0_125 = arith.constant 0 : index
    %c0_126 = arith.constant 0 : index
    %236 = vector.load %arg16[%c1_124, %c0_125, %c0_126] : memref<2x1x32xf32, #tpu.memory_space<vmem>>, vector<1x1x32xf32>
    %237 = vector.shape_cast %236 : vector<1x1x32xf32> to vector<1x32xf32>
    %238 = vector.broadcast %237 : vector<1x32xf32> to vector<16x32xf32>
    %239 = arith.addf %235, %238 : vector<16x32xf32>
    %240 = arith.addf %187, %239 : vector<16x32xf32>
    %c1_127 = arith.constant 1 : index
    %c0_128 = arith.constant 0 : index
    %c0_129 = arith.constant 0 : index
    %241 = vector.load %arg17[%c1_127, %c0_128, %c0_129] : memref<2x1x32xf32, #tpu.memory_space<vmem>>, vector<1x1x32xf32>
    %242 = vector.shape_cast %241 : vector<1x1x32xf32> to vector<1x32xf32>
    %c1_130 = arith.constant 1 : index
    %c0_131 = arith.constant 0 : index
    %c0_132 = arith.constant 0 : index
    %243 = vector.load %arg18[%c1_130, %c0_131, %c0_132] : memref<2x1x32xf32, #tpu.memory_space<vmem>>, vector<1x1x32xf32>
    %244 = vector.shape_cast %243 : vector<1x1x32xf32> to vector<1x32xf32>
    %cst_133 = arith.constant dense<0.000000e+00> : vector<16xf32>
    %245 = vector.multi_reduction <add>, %240, %cst_133 [1] : vector<16x32xf32> to vector<16xf32>
    %246 = vector.shape_cast %245 : vector<16xf32> to vector<16x1xf32>
    %cst_134 = arith.constant 3.200000e+01 : f32
    %247 = vector.broadcast %cst_134 : f32 to vector<16x1xf32>
    %248 = arith.divf %246, %247 : vector<16x1xf32>
    %249 = vector.broadcast %248 : vector<16x1xf32> to vector<16x32xf32>
    %250 = arith.subf %240, %249 : vector<16x32xf32>
    %251 = arith.mulf %250, %250 : vector<16x32xf32>
    %cst_135 = arith.constant dense<0.000000e+00> : vector<16xf32>
    %252 = vector.multi_reduction <add>, %251, %cst_135 [1] : vector<16x32xf32> to vector<16xf32>
    %253 = vector.shape_cast %252 : vector<16xf32> to vector<16x1xf32>
    %cst_136 = arith.constant 3.200000e+01 : f32
    %254 = vector.broadcast %cst_136 : f32 to vector<16x1xf32>
    %255 = arith.divf %253, %254 : vector<16x1xf32>
    %256 = vector.broadcast %248 : vector<16x1xf32> to vector<16x32xf32>
    %257 = arith.subf %240, %256 : vector<16x32xf32>
    %cst_137 = arith.constant 9.99999996E-13 : f32
    %258 = vector.broadcast %cst_137 : f32 to vector<16x1xf32>
    %259 = arith.addf %255, %258 : vector<16x1xf32>
    %260 = math.rsqrt %259 : vector<16x1xf32>
    %261 = vector.broadcast %260 : vector<16x1xf32> to vector<16x32xf32>
    %262 = arith.mulf %257, %261 : vector<16x32xf32>
    %263 = vector.broadcast %242 : vector<1x32xf32> to vector<16x32xf32>
    %264 = arith.mulf %262, %263 : vector<16x32xf32>
    %265 = vector.broadcast %244 : vector<1x32xf32> to vector<16x32xf32>
    %266 = arith.addf %264, %265 : vector<16x32xf32>
    %267 = arith.truncf %266 : vector<16x32xf32> to vector<16x32xbf16>
    %c1_138 = arith.constant 1 : index
    %c0_139 = arith.constant 0 : index
    %c0_140 = arith.constant 0 : index
    %268 = vector.load %arg19[%c1_138, %c0_139, %c0_140] : memref<2x32x64xbf16, #tpu.memory_space<vmem>>, vector<1x32x64xbf16>
    %269 = vector.shape_cast %268 : vector<1x32x64xbf16> to vector<32x64xbf16>
    %cst_141 = arith.constant dense<0.000000e+00> : vector<16x64xf32>
    %270 = tpu.matmul %267, %269, %cst_141 {dimension_numbers = #tpu.dot_dimension_numbers<[1], [0], [0], [1], [0, 0, 1, 1], [], []>} : vector<16x32xbf16>, vector<32x64xbf16>, vector<16x64xf32> -> vector<16x64xf32>
    %c1_142 = arith.constant 1 : index
    %c0_143 = arith.constant 0 : index
    %c0_144 = arith.constant 0 : index
    %271 = vector.load %arg20[%c1_142, %c0_143, %c0_144] : memref<2x1x64xf32, #tpu.memory_space<vmem>>, vector<1x1x64xf32>
    %272 = vector.shape_cast %271 : vector<1x1x64xf32> to vector<1x64xf32>
    %273 = vector.broadcast %272 : vector<1x64xf32> to vector<16x64xf32>
    %274 = arith.addf %270, %273 : vector<16x64xf32>
    %cst_145 = arith.constant 5.000000e-01 : f32
    %275 = vector.broadcast %cst_145 : f32 to vector<16x64xf32>
    %276 = arith.mulf %275, %274 : vector<16x64xf32>
    %cst_146 = arith.constant 4.471500e-02 : f32
    %277 = vector.broadcast %cst_146 : f32 to vector<16x64xf32>
    %278 = arith.mulf %277, %274 : vector<16x64xf32>
    %279 = arith.mulf %278, %274 : vector<16x64xf32>
    %280 = arith.mulf %279, %274 : vector<16x64xf32>
    %281 = arith.addf %274, %280 : vector<16x64xf32>
    %cst_147 = arith.constant 0.797884583 : f32
    %282 = vector.broadcast %cst_147 : f32 to vector<16x64xf32>
    %283 = arith.mulf %282, %281 : vector<16x64xf32>
    %284 = math.tanh %283 : vector<16x64xf32>
    %cst_148 = arith.constant 1.000000e+00 : f32
    %285 = vector.broadcast %cst_148 : f32 to vector<16x64xf32>
    %286 = arith.addf %285, %284 : vector<16x64xf32>
    %287 = arith.mulf %276, %286 : vector<16x64xf32>
    %288 = arith.truncf %287 : vector<16x64xf32> to vector<16x64xbf16>
    %c1_149 = arith.constant 1 : index
    %c0_150 = arith.constant 0 : index
    %c0_151 = arith.constant 0 : index
    %289 = vector.load %arg21[%c1_149, %c0_150, %c0_151] : memref<2x64x32xbf16, #tpu.memory_space<vmem>>, vector<1x64x32xbf16>
    %290 = vector.shape_cast %289 : vector<1x64x32xbf16> to vector<64x32xbf16>
    %cst_152 = arith.constant dense<0.000000e+00> : vector<16x32xf32>
    %291 = tpu.matmul %288, %290, %cst_152 {dimension_numbers = #tpu.dot_dimension_numbers<[1], [0], [0], [1], [0, 0, 1, 1], [], []>} : vector<16x64xbf16>, vector<64x32xbf16>, vector<16x32xf32> -> vector<16x32xf32>
    %c1_153 = arith.constant 1 : index
    %c0_154 = arith.constant 0 : index
    %c0_155 = arith.constant 0 : index
    %292 = vector.load %arg22[%c1_153, %c0_154, %c0_155] : memref<2x1x32xf32, #tpu.memory_space<vmem>>, vector<1x1x32xf32>
    %293 = vector.shape_cast %292 : vector<1x1x32xf32> to vector<1x32xf32>
    %294 = vector.broadcast %293 : vector<1x32xf32> to vector<16x32xf32>
    %295 = arith.addf %291, %294 : vector<16x32xf32>
    %296 = arith.addf %266, %295 : vector<16x32xf32>
    %c1_156 = arith.constant 1 : index
    %c0_157 = arith.constant 0 : index
    %c0_158 = arith.constant 0 : index
    %297 = vector.load %arg23[%c1_156, %c0_157, %c0_158] : memref<2x1x32xf32, #tpu.memory_space<vmem>>, vector<1x1x32xf32>
    %298 = vector.shape_cast %297 : vector<1x1x32xf32> to vector<1x32xf32>
    %c1_159 = arith.constant 1 : index
    %c0_160 = arith.constant 0 : index
    %c0_161 = arith.constant 0 : index
    %299 = vector.load %arg24[%c1_159, %c0_160, %c0_161] : memref<2x1x32xf32, #tpu.memory_space<vmem>>, vector<1x1x32xf32>
    %300 = vector.shape_cast %299 : vector<1x1x32xf32> to vector<1x32xf32>
    %cst_162 = arith.constant dense<0.000000e+00> : vector<16xf32>
    %301 = vector.multi_reduction <add>, %296, %cst_162 [1] : vector<16x32xf32> to vector<16xf32>
    %302 = vector.shape_cast %301 : vector<16xf32> to vector<16x1xf32>
    %cst_163 = arith.constant 3.200000e+01 : f32
    %303 = vector.broadcast %cst_163 : f32 to vector<16x1xf32>
    %304 = arith.divf %302, %303 : vector<16x1xf32>
    %305 = vector.broadcast %304 : vector<16x1xf32> to vector<16x32xf32>
    %306 = arith.subf %296, %305 : vector<16x32xf32>
    %307 = arith.mulf %306, %306 : vector<16x32xf32>
    %cst_164 = arith.constant dense<0.000000e+00> : vector<16xf32>
    %308 = vector.multi_reduction <add>, %307, %cst_164 [1] : vector<16x32xf32> to vector<16xf32>
    %309 = vector.shape_cast %308 : vector<16xf32> to vector<16x1xf32>
    %cst_165 = arith.constant 3.200000e+01 : f32
    %310 = vector.broadcast %cst_165 : f32 to vector<16x1xf32>
    %311 = arith.divf %309, %310 : vector<16x1xf32>
    %312 = vector.broadcast %304 : vector<16x1xf32> to vector<16x32xf32>
    %313 = arith.subf %296, %312 : vector<16x32xf32>
    %cst_166 = arith.constant 9.99999996E-13 : f32
    %314 = vector.broadcast %cst_166 : f32 to vector<16x1xf32>
    %315 = arith.addf %311, %314 : vector<16x1xf32>
    %316 = math.rsqrt %315 : vector<16x1xf32>
    %317 = vector.broadcast %316 : vector<16x1xf32> to vector<16x32xf32>
    %318 = arith.mulf %313, %317 : vector<16x32xf32>
    %319 = vector.broadcast %298 : vector<1x32xf32> to vector<16x32xf32>
    %320 = arith.mulf %318, %319 : vector<16x32xf32>
    %321 = vector.broadcast %300 : vector<1x32xf32> to vector<16x32xf32>
    %322 = arith.addf %320, %321 : vector<16x32xf32>
    %c0_167 = arith.constant 0 : index
    %c0_168 = arith.constant 0 : index
    %323 = vector.load %arg8[%c0_167, %c0_168] : memref<2x16xbf16, #tpu.memory_space<vmem>>, vector<2x16xbf16>
    %324 = arith.truncf %322 : vector<16x32xf32> to vector<16x32xbf16>
    %cst_169 = arith.constant dense<0.000000e+00> : vector<2x32xf32>
    %325 = tpu.matmul %323, %324, %cst_169 {dimension_numbers = #tpu.dot_dimension_numbers<[1], [0], [0], [1], [0, 0, 1, 1], [], []>} : vector<2x16xbf16>, vector<16x32xbf16>, vector<2x32xf32> -> vector<2x32xf32>
    %326 = arith.truncf %325 : vector<2x32xf32> to vector<2x32xbf16>
    %c0_170 = arith.constant 0 : index
    %c0_171 = arith.constant 0 : index
    %327 = vector.load %arg25[%c0_170, %c0_171] : memref<32x128xbf16, #tpu.memory_space<vmem>>, vector<32x128xbf16>
    %cst_172 = arith.constant dense<0.000000e+00> : vector<2x128xf32>
    %328 = tpu.matmul %326, %327, %cst_172 {dimension_numbers = #tpu.dot_dimension_numbers<[1], [0], [0], [1], [0, 0, 1, 1], [], []>} : vector<2x32xbf16>, vector<32x128xbf16>, vector<2x128xf32> -> vector<2x128xf32>
    %c0_173 = arith.constant 0 : index
    %c0_174 = arith.constant 0 : index
    %329 = vector.load %arg26[%c0_173, %c0_174] : memref<1x128xf32, #tpu.memory_space<vmem>>, vector<1x128xf32>
    %330 = vector.broadcast %329 : vector<1x128xf32> to vector<2x128xf32>
    %331 = arith.addf %328, %330 : vector<2x128xf32>
    %cst_175 = arith.constant 0.000000e+00 : f32
    %332 = vector.broadcast %cst_175 : f32 to vector<2x128xf32>
    %333 = arith.subf %332, %331 : vector<2x128xf32>
    %334 = math.exp %333 : vector<2x128xf32>
    %cst_176 = arith.constant 1.000000e+00 : f32
    %335 = vector.broadcast %cst_176 : f32 to vector<2x128xf32>
    %336 = arith.addf %335, %334 : vector<2x128xf32>
    %337 = tpu.reciprocal %336 {approx = true} : vector<2x128xf32> -> vector<2x128xf32>
    %c0_177 = arith.constant 0 : index
    %c0_178 = arith.constant 0 : index
    %338 = vector.load %arg27[%c0_177, %c0_178] : memref<2x128xf32, #tpu.memory_space<vmem>>, vector<2x128xf32>
    tpu.vector_store %arg27[%c0_177, %c0_178], %337 {strides = array<i32>} : memref<2x128xf32, #tpu.memory_space<vmem>>, vector<2x128xf32>,
    return
  }
}

</mosaic_0001>

<llo_original>
// kernel: tpu_custom_call.1
$region0: #{tpu_custom_call.1}
  #allocation0 [shape = 'u32[]', space=smem, size = 0x4, offset = 0x4, fixed_abs, tag = 'smem constant byte address 0x4 - core index']
  #allocation1 [shape = 'u32[144,128]{1,0:T(1,128)}', space=vmem, size = 0x12000, scoped, tag = 'internal scratch']
  %s0 = inlined_call_operand.vmem [shape: s32[16,1], index: 0, kind: input, shape index: {}]
  %s1 = inlined_call_operand.hbm [shape: f32[1,16], index: 1, kind: input, shape index: {}]
  %s2 = inlined_call_operand.vmem [shape: bf16[128,32], index: 2, kind: input, shape index: {}]
  %s3 = inlined_call_operand.hbm [shape: f32[1,32], index: 3, kind: input, shape index: {}]
  %s4 = inlined_call_operand.hbm [shape: f32[1,32], index: 4, kind: input, shape index: {}]
  %s5 = inlined_call_operand.vmem [shape: f32[64,32], index: 5, kind: input, shape index: {}]
  %s6 = inlined_call_operand.vmem [shape: bf16[64,64], index: 6, kind: input, shape index: {}]
  %s7 = inlined_call_operand.vmem [shape: f32[16,64], index: 7, kind: input, shape index: {}]
  %s8 = inlined_call_operand.vmem [shape: bf16[2,16], index: 8, kind: input, shape index: {}]
  %s9 = inlined_call_operand.vmem [shape: bf16[2,32,32], index: 9, kind: input, shape index: {}]
  %s10 = inlined_call_operand.vmem [shape: f32[2,1,32], index: 10, kind: input, shape index: {}]
  %s11 = inlined_call_operand.vmem [shape: bf16[2,32,32], index: 11, kind: input, shape index: {}]
  %s12 = inlined_call_operand.vmem [shape: f32[2,1,32], index: 12, kind: input, shape index: {}]
  %s13 = inlined_call_operand.vmem [shape: bf16[2,32,32], index: 13, kind: input, shape index: {}]
  %s14 = inlined_call_operand.vmem [shape: f32[2,1,32], index: 14, kind: input, shape index: {}]
  %s15 = inlined_call_operand.vmem [shape: bf16[2,32,32], index: 15, kind: input, shape index: {}]
  %s16 = inlined_call_operand.vmem [shape: f32[2,1,32], index: 16, kind: input, shape index: {}]
  %s17 = inlined_call_operand.vmem [shape: f32[2,1,32], index: 17, kind: input, shape index: {}]
  %s18 = inlined_call_operand.vmem [shape: f32[2,1,32], index: 18, kind: input, shape index: {}]
  %s19 = inlined_call_operand.vmem [shape: bf16[2,32,64], index: 19, kind: input, shape index: {}]
  %s20 = inlined_call_operand.vmem [shape: f32[2,1,64], index: 20, kind: input, shape index: {}]
  %s21 = inlined_call_operand.vmem [shape: bf16[2,64,32], index: 21, kind: input, shape index: {}]
  %s22 = inlined_call_operand.vmem [shape: f32[2,1,32], index: 22, kind: input, shape index: {}]
  %s23 = inlined_call_operand.vmem [shape: f32[2,1,32], index: 23, kind: input, shape index: {}]
  %s24 = inlined_call_operand.vmem [shape: f32[2,1,32], index: 24, kind: input, shape index: {}]
  %s25 = inlined_call_operand.vmem [shape: bf16[32,128], index: 25, kind: input, shape index: {}]
  %s26 = inlined_call_operand.vmem [shape: f32[1,128], index: 26, kind: input, shape index: {}]
  %s27 = inlined_call_operand.hbm [shape: f32[2,128], index: 27, kind: output, shape index: {}]
  %s28 = sld [smem:[#allocation0]]
  $region130: #{tpu_custom_call.1} parent=0
    _
  %s30 = ssub.s32 1, %s28
  %s31 = scalar_select 0, %s30, %s28
  $region1: #{tpu_custom_call.1} parent=0
    #allocation2 [shape = 'u8[512]{0}', space=vmem, size = 0x400, scoped, tag = 'input window, operand 1, single buffered']
    #allocation3 [shape = 's32[1]{0}', space=sflag, size = 0x4, scoped, tag = 'scoped memory for tpu_custom_call.1']
    #allocation4 [shape = 's32[1]{0}', space=sflag, size = 0x4, scoped, tag = 'scoped memory for tpu_custom_call.1']
    #allocation5 [shape = 'u8[512]{0}', space=vmem, size = 0x400, scoped, tag = 'input window, operand 3, single buffered']
    #allocation6 [shape = 's32[1]{0}', space=sflag, size = 0x4, scoped, tag = 'scoped memory for tpu_custom_call.1']
    #allocation7 [shape = 'u8[512]{0}', space=vmem, size = 0x400, scoped, tag = 'input window, operand 4, single buffered']
    #allocation8 [shape = 'u8[1024]{0}', space=vmem, size = 0x400, scoped, tag = 'output window, operand 0, single buffered']
    %32 = vsyncpa [#allocation3], 0
    %33 = vsyncpa [#allocation6], 0
    %34 = vsyncpa [#allocation4], 0
    // Predicated region
    $region2: #{tpu_custom_call.1} parent=1 // pred_check
      _
    $region3: #{tpu_custom_call.1} parent=1 // pred_check_branch
      %36 = sbr.rel (0) target = $region5
    $region4: #{tpu_custom_call.1} parent=1 // pred_region
      _
    $region5: #{tpu_custom_call.1} parent=1 // pred_fallthru
      _
    // Predicated region
    $region6: #{tpu_custom_call.1} parent=1 // pred_check
      _
    $region7: #{tpu_custom_call.1} parent=1 // pred_check_branch
      %38 = sbr.rel (0) target = $region9
    $region8: #{tpu_custom_call.1} parent=1 // pred_region
      %s40 = ssub.s32 16, 16
      %41 = vsyncadd [#allocation3], %s40
      %s43 = sshll.u32 [#allocation2], 4
      %s44 = int_to_ptr.vmem [resolvable:$true] %s43
      %46 = dma.hbm_to_vmem [thread:$0]  %s1, 16, %s44, [#allocation3]
    $region9: #{tpu_custom_call.1} parent=1 // pred_fallthru
      _
    // Predicated region
    $region10: #{tpu_custom_call.1} parent=1 // pred_check
      _
    $region11: #{tpu_custom_call.1} parent=1 // pred_check_branch
      %48 = sbr.rel (0) target = $region13
    $region12: #{tpu_custom_call.1} parent=1 // pred_region
      _
    $region13: #{tpu_custom_call.1} parent=1 // pred_fallthru
      _
    // Predicated region
    $region14: #{tpu_custom_call.1} parent=1 // pred_check
      _
    $region15: #{tpu_custom_call.1} parent=1 // pred_check_branch
      %50 = sbr.rel (0) target = $region17
    $region16: #{tpu_custom_call.1} parent=1 // pred_region
      %s52 = ssub.s32 16, 16
      %53 = vsyncadd [#allocation6], %s52
      %s55 = sshll.u32 [#allocation5], 4
      %s56 = int_to_ptr.vmem [resolvable:$true] %s55
      %58 = dma.hbm_to_vmem [thread:$0]  %s3, 16, %s56, [#allocation6]
    $region17: #{tpu_custom_call.1} parent=1 // pred_fallthru
      _
    // Predicated region
    $region18: #{tpu_custom_call.1} parent=1 // pred_check
      _
    $region19: #{tpu_custom_call.1} parent=1 // pred_check_branch
      %60 = sbr.rel (0) target = $region21
    $region20: #{tpu_custom_call.1} parent=1 // pred_region
      %s62 = ssub.s32 16, 16
      %63 = vsyncadd [#allocation6], %s62
      %s65 = sshll.u32 [#allocation7], 4
      %s66 = int_to_ptr.vmem [resolvable:$true] %s65
      %68 = dma.hbm_to_vmem [thread:$0]  %s4, 16, %s66, [#allocation6]
    $region21: #{tpu_custom_call.1} parent=1 // pred_fallthru
      _
    // Predicated region
    $region22: #{tpu_custom_call.1} parent=1 // pred_check
      _
    $region23: #{tpu_custom_call.1} parent=1 // pred_check_branch
      %70 = sbr.rel (0) target = $region25
    $region24: #{tpu_custom_call.1} parent=1 // pred_region
      _
    $region25: #{tpu_custom_call.1} parent=1 // pred_fallthru
      _
    // Predicated region
    $region26: #{tpu_custom_call.1} parent=1 // pred_check
      _
    $region27: #{tpu_custom_call.1} parent=1 // pred_check_branch
      %72 = sbr.rel (0) target = $region29
    $region28: #{tpu_custom_call.1} parent=1 // pred_region
      _
    $region29: #{tpu_custom_call.1} parent=1 // pred_fallthru
      _
    // Predicated region
    $region30: #{tpu_custom_call.1} parent=1 // pred_check
      _
    $region31: #{tpu_custom_call.1} parent=1 // pred_check_branch
      %74 = sbr.rel (0) target = $region33
    $region32: #{tpu_custom_call.1} parent=1 // pred_region
      _
    $region33: #{tpu_custom_call.1} parent=1 // pred_fallthru
      _
    // Predicated region
    $region34: #{tpu_custom_call.1} parent=1 // pred_check
      _
    $region35: #{tpu_custom_call.1} parent=1 // pred_check_branch
      %76 = sbr.rel (0) target = $region37
    $region36: #{tpu_custom_call.1} parent=1 // pred_region
      _
    $region37: #{tpu_custom_call.1} parent=1 // pred_fallthru
      _
    // Predicated region
    $region38: #{tpu_custom_call.1} parent=1 // pred_check
      _
    $region39: #{tpu_custom_call.1} parent=1 // pred_check_branch
      %78 = sbr.rel (0) target = $region41
    $region40: #{tpu_custom_call.1} parent=1 // pred_region
      _
    $region41: #{tpu_custom_call.1} parent=1 // pred_fallthru
      _
    // Predicated region
    $region42: #{tpu_custom_call.1} parent=1 // pred_check
      _
    $region43: #{tpu_custom_call.1} parent=1 // pred_check_branch
      %80 = sbr.rel (0) target = $region45
    $region44: #{tpu_custom_call.1} parent=1 // pred_region
      _
    $region45: #{tpu_custom_call.1} parent=1 // pred_fallthru
      _
    // Predicated region
    $region46: #{tpu_custom_call.1} parent=1 // pred_check
      _
    $region47: #{tpu_custom_call.1} parent=1 // pred_check_branch
      %82 = sbr.rel (0) target = $region49
    $region48: #{tpu_custom_call.1} parent=1 // pred_region
      _
    $region49: #{tpu_custom_call.1} parent=1 // pred_fallthru
      _
    // Predicated region
    $region50: #{tpu_custom_call.1} parent=1 // pred_check
      _
    $region51: #{tpu_custom_call.1} parent=1 // pred_check_branch
      %84 = sbr.rel (0) target = $region53
    $region52: #{tpu_custom_call.1} parent=1 // pred_region
      _
    $region53: #{tpu_custom_call.1} parent=1 // pred_fallthru
      _
    // Predicated region
    $region54: #{tpu_custom_call.1} parent=1 // pred_check
      _
    $region55: #{tpu_custom_call.1} parent=1 // pred_check_branch
      %86 = sbr.rel (0) target = $region57
    $region56: #{tpu_custom_call.1} parent=1 // pred_region
      _
    $region57: #{tpu_custom_call.1} parent=1 // pred_fallthru
      _
    // Predicated region
    $region58: #{tpu_custom_call.1} parent=1 // pred_check
      _
    $region59: #{tpu_custom_call.1} parent=1 // pred_check_branch
      %88 = sbr.rel (0) target = $region61
    $region60: #{tpu_custom_call.1} parent=1 // pred_region
      _
    $region61: #{tpu_custom_call.1} parent=1 // pred_fallthru
      _
    // Predicated region
    $region62: #{tpu_custom_call.1} parent=1 // pred_check
      _
    $region63: #{tpu_custom_call.1} parent=1 // pred_check_branch
      %90 = sbr.rel (0) target = $region65
    $region64: #{tpu_custom_call.1} parent=1 // pred_region
      _
    $region65: #{tpu_custom_call.1} parent=1 // pred_fallthru
      _
    // Predicated region
    $region66: #{tpu_custom_call.1} parent=1 // pred_check
      _
    $region67: #{tpu_custom_call.1} parent=1 // pred_check_branch
      %92 = sbr.rel (0) target = $region69
    $region68: #{tpu_custom_call.1} parent=1 // pred_region
      _
    $region69: #{tpu_custom_call.1} parent=1 // pred_fallthru
      _
    // Predicated region
    $region70: #{tpu_custom_call.1} parent=1 // pred_check
      _
    $region71: #{tpu_custom_call.1} parent=1 // pred_check_branch
      %94 = sbr.rel (0) target = $region73
    $region72: #{tpu_custom_call.1} parent=1 // pred_region
      _
    $region73: #{tpu_custom_call.1} parent=1 // pred_fallthru
      _
    // Predicated region
    $region74: #{tpu_custom_call.1} parent=1 // pred_check
      _
    $region75: #{tpu_custom_call.1} parent=1 // pred_check_branch
      %96 = sbr.rel (0) target = $region77
    $region76: #{tpu_custom_call.1} parent=1 // pred_region
      _
    $region77: #{tpu_custom_call.1} parent=1 // pred_fallthru
      _
    // Predicated region
    $region78: #{tpu_custom_call.1} parent=1 // pred_check
      _
    $region79: #{tpu_custom_call.1} parent=1 // pred_check_branch
      %98 = sbr.rel (0) target = $region81
    $region80: #{tpu_custom_call.1} parent=1 // pred_region
      _
    $region81: #{tpu_custom_call.1} parent=1 // pred_fallthru
      _
    // Predicated region
    $region82: #{tpu_custom_call.1} parent=1 // pred_check
      _
    $region83: #{tpu_custom_call.1} parent=1 // pred_check_branch
      %100 = sbr.rel (0) target = $region85
    $region84: #{tpu_custom_call.1} parent=1 // pred_region
      _
    $region85: #{tpu_custom_call.1} parent=1 // pred_fallthru
      _
    // Predicated region
    $region86: #{tpu_custom_call.1} parent=1 // pred_check
      _
    $region87: #{tpu_custom_call.1} parent=1 // pred_check_branch
      %102 = sbr.rel (0) target = $region89
    $region88: #{tpu_custom_call.1} parent=1 // pred_region
      _
    $region89: #{tpu_custom_call.1} parent=1 // pred_fallthru
      _
    // Predicated region
    $region90: #{tpu_custom_call.1} parent=1 // pred_check
      _
    $region91: #{tpu_custom_call.1} parent=1 // pred_check_branch
      %104 = sbr.rel (0) target = $region93
    $region92: #{tpu_custom_call.1} parent=1 // pred_region
      _
    $region93: #{tpu_custom_call.1} parent=1 // pred_fallthru
      _
    // Predicated region
    $region94: #{tpu_custom_call.1} parent=1 // pred_check
      _
    $region95: #{tpu_custom_call.1} parent=1 // pred_check_branch
      %106 = sbr.rel (0) target = $region97
    $region96: #{tpu_custom_call.1} parent=1 // pred_region
      _
    $region97: #{tpu_custom_call.1} parent=1 // pred_fallthru
      _
    // Predicated region
    $region98: #{tpu_custom_call.1} parent=1 // pred_check
      _
    $region99: #{tpu_custom_call.1} parent=1 // pred_check_branch
      %108 = sbr.rel (0) target = $region101
    $region100: #{tpu_custom_call.1} parent=1 // pred_region
      _
    $region101: #{tpu_custom_call.1} parent=1 // pred_fallthru
      _
    // Predicated region
    $region102: #{tpu_custom_call.1} parent=1 // pred_check
      _
    $region103: #{tpu_custom_call.1} parent=1 // pred_check_branch
      %110 = sbr.rel (0) target = $region105
    $region104: #{tpu_custom_call.1} parent=1 // pred_region
      _
    $region105: #{tpu_custom_call.1} parent=1 // pred_fallthru
      _
    // Predicated region
    $region106: #{tpu_custom_call.1} parent=1 // pred_check
      _
    $region107: #{tpu_custom_call.1} parent=1 // pred_check_branch
      %112 = sbr.rel (0) target = $region109
    $region108: #{tpu_custom_call.1} parent=1 // pred_region
      _
    $region109: #{tpu_custom_call.1} parent=1 // pred_fallthru
      _
    // Predicated region
    $region110: #{tpu_custom_call.1} parent=1 // pred_check
      _
    $region111: #{tpu_custom_call.1} parent=1 // pred_check_branch
      %114 = sbr.rel (0) target = $region113
    $region112: #{tpu_custom_call.1} parent=1 // pred_region
      %115 = dma.done [#allocation3], 16
    $region113: #{tpu_custom_call.1} parent=1 // pred_fallthru
      _
    // Predicated region
    $region114: #{tpu_custom_call.1} parent=1 // pred_check
      _
    $region115: #{tpu_custom_call.1} parent=1 // pred_check_branch
      %117 = sbr.rel (0) target = $region117
    $region116: #{tpu_custom_call.1} parent=1 // pred_region
      %118 = dma.done [#allocation6], 16
    $region117: #{tpu_custom_call.1} parent=1 // pred_fallthru
      _
    // Predicated region
    $region118: #{tpu_custom_call.1} parent=1 // pred_check
      _
    $region119: #{tpu_custom_call.1} parent=1 // pred_check_branch
      %120 = sbr.rel (0) target = $region121
    $region120: #{tpu_custom_call.1} parent=1 // pred_region
      %121 = dma.done [#allocation6], 16
    $region121: #{tpu_custom_call.1} parent=1 // pred_fallthru
      _
    %v123 = vlaneseq
    %v124 = vand.u32 %v123, 127
    %v125 = vlaneseq
    %v126 = vshrl.u32 %v125, 7
    %v127 = vadd.s32 %v126, 8
    %v128 = vand.u32 %v126, 7
    %v129 = vand.u32 %v127, 7
    %v130 = vld [vmem:[%s0] sm:$0xff]
    %v131 = vld [vmem:[%s0 + $0x8] sm:$0xff]
    %132 = vset.pattern.permute.xlu0 0
    %133 = vperm.xlu0 %132, %v130
    %v134 = vpop.permute.xlu0 %133
    %135 = vset.pattern.permute.xlu0 0
    %136 = vperm.xlu0 %135, %v131
    %v137 = vpop.permute.xlu0 %136
    %vm138 = vcmp.eq.s32.totalorder %v124, %v134
    %vm139 = vcmp.eq.s32.totalorder %v124, %v137
    %v140 = vadd.s32 %v128, 100
    %v141 = vadd.s32 %v129, 100
    %vm142 = vcmp.eq.s32.totalorder %v124, %v140
    %vm143 = vcmp.eq.s32.totalorder %v124, %v141
    %vm144 = vmor %vm138, %vm142
    %vm145 = vmor %vm139, %vm143
    %vm146 = vcmp.eq.s32.totalorder %v124, 116
    %vm147 = vmor %vm144, %vm146
    %vm148 = vmor %vm145, %vm146
    %v149 = vsel %vm147, 1.0, 0.0
    %v150 = vsel %vm148, 1.0, 0.0
    %v151 = vpack.c.bf16 %v150, %v149
    %v152 = vld [vmem:[%s2] sm:$0xf]
    %v153 = vld [vmem:[%s2 + $0x4] sm:$0xf]
    %v154 = vld [vmem:[%s2 + $0x8] sm:$0xf]
    %v155 = vld [vmem:[%s2 + $0xc] sm:$0xf]
    %v156 = vld [vmem:[%s2 + $0x10] sm:$0xf]
    %v157 = vld [vmem:[%s2 + $0x14] sm:$0xf]
    %v158 = vld [vmem:[%s2 + $0x18] sm:$0xf]
    %v159 = vld [vmem:[%s2 + $0x1c] sm:$0xf]
    %v160 = vld [vmem:[%s2 + $0x20] sm:$0xf]
    %v161 = vld [vmem:[%s2 + $0x24] sm:$0xf]
    %v162 = vld [vmem:[%s2 + $0x28] sm:$0xf]
    %v163 = vld [vmem:[%s2 + $0x2c] sm:$0xf]
    %v164 = vld [vmem:[%s2 + $0x30] sm:$0xf]
    %v165 = vld [vmem:[%s2 + $0x34] sm:$0xf]
    %v166 = vld [vmem:[%s2 + $0x38] sm:$0xf]
    %v167 = vld [vmem:[%s2 + $0x3c] sm:$0xf]
    %v184 = vunpack.c.l.b16 %v152
    %v185 = vunpack.c.l.b16 %v153
    %v186 = vunpack.c.l.b16 %v154
    %v187 = vunpack.c.l.b16 %v155
    %v188 = vunpack.c.l.b16 %v156
    %v189 = vunpack.c.l.b16 %v157
    %v190 = vunpack.c.l.b16 %v158
    %v191 = vunpack.c.l.b16 %v159
    %v192 = vunpack.c.l.b16 %v160
    %v193 = vunpack.c.l.b16 %v161
    %v194 = vunpack.c.l.b16 %v162
    %v195 = vunpack.c.l.b16 %v163
    %v196 = vunpack.c.l.b16 %v164
    %v197 = vunpack.c.l.b16 %v165
    %v198 = vunpack.c.l.b16 %v166
    %v199 = vunpack.c.l.b16 %v167
    %v200 = vpack.c.b16 %v185, %v184
    %v201 = vpack.c.b16 %v187, %v186
    %v202 = vpack.c.b16 %v189, %v188
    %v203 = vpack.c.b16 %v191, %v190
    %v204 = vpack.c.b16 %v193, %v192
    %v205 = vpack.c.b16 %v195, %v194
    %v206 = vpack.c.b16 %v197, %v196
    %v207 = vpack.c.b16 %v199, %v198
    %216 = vmatprep.subr.bf16.mxu0 0
    %217 = vmatpush1.bf16.msra.mxu0 %v200
    %218 = vmatprep.subr.bf16.mxu0 0
    %219 = vmatpush1.bf16.msra.mxu0 %v201
    %220 = vmatprep.subr.bf16.mxu0 0
    %221 = vmatpush1.bf16.msra.mxu0 %v202
    %222 = vmatprep.subr.bf16.mxu0 0
    %223 = vmatpush1.bf16.msra.mxu0 %v203
    %224 = vmatprep.subr.bf16.mxu0 0
    %225 = vmatpush1.bf16.msra.mxu0 %v204
    %226 = vmatprep.subr.bf16.mxu0 0
    %227 = vmatpush1.bf16.msra.mxu0 %v205
    %228 = vmatprep.subr.bf16.mxu0 0
    %229 = vmatpush1.bf16.msra.mxu0 %v206
    %230 = vmatprep.subr.bf16.mxu0 0
    %231 = vmatpush1.bf16.msra.mxu0 %v207
    %232 = vmatprep.subr.bf16.mxu0 0
    %233 = vmatpush1.bf16.msra.mxu0 0
    %234 = vmatprep.subr.bf16.mxu0 0
    %235 = vmatpush1.bf16.msra.mxu0 0
    %236 = vmatprep.subr.bf16.mxu0 0
    %237 = vmatpush1.bf16.msra.mxu0 0
    %238 = vmatprep.subr.bf16.mxu0 0
    %239 = vmatpush1.bf16.msra.mxu0 0
    %240 = vmatprep.subr.bf16.mxu0 0
    %241 = vmatpush1.bf16.msra.mxu0 0
    %242 = vmatprep.subr.bf16.mxu0 0
    %243 = vmatpush1.bf16.msra.mxu0 0
    %244 = vmatprep.subr.bf16.mxu0 0
    %245 = vmatpush1.bf16.msra.mxu0 0
    %246 = vmatprep.subr.bf16.mxu0 0
    %247 = vmatpush1.bf16.msra.mxu0 0
    %248 = vmatprep.mubr.bf16.mxu0 0
    %249 = vmatmul.mubr.bf16.gmra.mrb[0].mxu0 %v151
    %v250 = vpop.f32.mrb[0].mxu0
    %v251 = vadd.f32 0.0, %v250
    %v252 = vpop.f32.mrb[0].mxu0
    %v253 = vpop.f32.mrb[0].mxu0
    %v254 = vadd.f32 0.0, %v253
    %v255 = vpop.f32.mrb[0].mxu0
    %256 = vdwg.mxu0
    %v257 = vld [vmem:[#allocation5] sm:$0x1]
    %v258 = vld [vmem:[#allocation7] sm:$0x1]
    %vm259 = vcmask 261120
    %v260 = vsel %vm259, %v251, 0.0
    %261 = vadd.xlane.f32.xlu0 %v260
    %v262 = vpop.xlane.xlu0 %261
    %v263 = vsel %vm259, %v254, 0.0
    %264 = vadd.xlane.f32.xlu0 %v263
    %v265 = vpop.xlane.xlu0 %264
    %v266 = vrcp.pop 32.0
    %v267 = vmul.f32 %v262, %v266
    %v268 = vmul.f32 %v265, %v266
    %v269 = vsub.f32 %v251, %v267
    %v270 = vsub.f32 %v254, %v268
    %v271 = vmul.f32 %v269, %v269
    %v272 = vmul.f32 %v270, %v270
    %v273 = vsel %vm259, %v271, 0.0
    %274 = vadd.xlane.f32.xlu0 %v273
    %v275 = vpop.xlane.xlu0 %274
    %v276 = vsel %vm259, %v272, 0.0
    %277 = vadd.xlane.f32.xlu0 %v276
    %v278 = vpop.xlane.xlu0 %277
    %v279 = vmul.f32 %v275, %v266
    %v280 = vmul.f32 %v278, %v266
    %v281 = vadd.f32 %v279, 1e-12
    %v282 = vadd.f32 %v280, 1e-12
    %v283 = vrsqrt.pop %v281
    %v284 = vrsqrt.pop %v282
    %v285 = vmul.f32 %v269, %v283
    %v286 = vmul.f32 %v270, %v284
    %v288 = vlaneseq
    %v289 = vshrl.u32 %v288, 7
    %v290 = vsub.s32 0, %v289
    %v291 = vrot.slane %v257, %v290
    %v293 = vmul.f32 %v285, %v291
    %v294 = vmul.f32 %v286, %v291
    %v296 = vlaneseq
    %v297 = vshrl.u32 %v296, 7
    %v298 = vsub.s32 0, %v297
    %v299 = vrot.slane %v258, %v298
    %v301 = vadd.f32 %v293, %v299
    %v302 = vadd.f32 %v294, %v299
    %v303 = vld [vmem:[#allocation2] sm:$0x1]
    %v305 = vlaneseq
    %v306 = vshrl.u32 %v305, 7
    %v307 = vsub.s32 0, %v306
    %v308 = vrot.slane %v303, %v307
    %309 = vrot.lane.b32.xlu0 %v308, 16
    %v310 = vpop.permute.xlu0 %309
    %312 = vrot.lane.b32.xlu0 %v308, 32
    %v313 = vpop.permute.xlu0 %312
    %315 = vrot.lane.b32.xlu0 %v308, 48
    %v316 = vpop.permute.xlu0 %315
    %vm318 = vcmask 130048
    %v319 = vsel %vm318, %v303, %v310
    %v320 = vsel %vm259, %v319, %v313
    %vm321 = vcmask 392192
    %v322 = vsel %vm321, %v320, %v316
    %v323 = vsub.f32 1.0, %v322
    %v324 = vmul.f32 %v323, -1e+09
    %v325 = vld [vmem:[%s5] sm:$0xff]
    %v326 = vld [vmem:[%s5 + $0x8] sm:$0xff]
    %v327 = vld [vmem:[%s5 + $0x10] sm:$0xff]
    %v328 = vld [vmem:[%s5 + $0x18] sm:$0xff]
    %v329 = vld [vmem:[%s5 + $0x20] sm:$0xff]
    %v330 = vld [vmem:[%s5 + $0x28] sm:$0xff]
    %v331 = vld [vmem:[%s5 + $0x30] sm:$0xff]
    %v332 = vld [vmem:[%s5 + $0x38] sm:$0xff]
    %v333 = vld [vmem:[%s7] sm:$0xff]
    %v334 = vld [vmem:[%s7 + $0x8] sm:$0xff]
    %v335 = vld [vmem:[%s6] sm:$0xf]
    %v336 = vld [vmem:[%s6 + $0x4] sm:$0xf]
    %v337 = vld [vmem:[%s6 + $0x8] sm:$0xf]
    %v338 = vld [vmem:[%s6 + $0xc] sm:$0xf]
    %v339 = vld [vmem:[%s6 + $0x10] sm:$0xf]
    %v340 = vld [vmem:[%s6 + $0x14] sm:$0xf]
    %v341 = vld [vmem:[%s6 + $0x18] sm:$0xf]
    %v342 = vld [vmem:[%s6 + $0x1c] sm:$0xf]
    %v343 = vpack.c.bf16 %v302, %v301
    %v344 = vld [vmem:[%s9] sm:$0xf]
    %v345 = vld [vmem:[%s9 + $0x4] sm:$0xf]
    %v346 = vld [vmem:[%s9 + $0x8] sm:$0xf]
    %v347 = vld [vmem:[%s9 + $0xc] sm:$0xf]
    %v348 = vld [vmem:[%s10] sm:$0x1]
    %v350 = vlaneseq
    %v351 = vshrl.u32 %v350, 7
    %v352 = vsub.s32 0, %v351
    %v353 = vrot.slane %v348, %v352
    %v359 = vunpack.c.l.b16 %v344
    %v360 = vunpack.c.l.b16 %v345
    %v361 = vunpack.c.l.b16 %v346
    %v362 = vunpack.c.l.b16 %v347
    %v363 = vpack.c.b16 %v360, %v359
    %v364 = vpack.c.b16 %v362, %v361
    %v368 = vsel %vm259, %v343, 0
    %370 = vmatprep.subr.bf16.mxu0 0
    %371 = vmatpush1.bf16.msra.mxu0 %v363
    %372 = vmatprep.subr.bf16.mxu0 0
    %373 = vmatpush1.bf16.msra.mxu0 %v364
    %374 = vmatprep.subr.bf16.mxu0 0
    %375 = vmatpush1.bf16.msra.mxu0 0
    %376 = vmatprep.subr.bf16.mxu0 0
    %377 = vmatpush1.bf16.msra.mxu0 0
    %378 = vmatprep.subr.bf16.mxu0 0
    %379 = vmatpush1.bf16.msra.mxu0 0
    %380 = vmatprep.subr.bf16.mxu0 0
    %381 = vmatpush1.bf16.msra.mxu0 0
    %382 = vmatprep.subr.bf16.mxu0 0
    %383 = vmatpush1.bf16.msra.mxu0 0
    %384 = vmatprep.subr.bf16.mxu0 0
    %385 = vmatpush1.bf16.msra.mxu0 0
    %386 = vmatprep.subr.bf16.mxu0 0
    %387 = vmatpush1.bf16.msra.mxu0 0
    %388 = vmatprep.subr.bf16.mxu0 0
    %389 = vmatpush1.bf16.msra.mxu0 0
    %390 = vmatprep.subr.bf16.mxu0 0
    %391 = vmatpush1.bf16.msra.mxu0 0
    %392 = vmatprep.subr.bf16.mxu0 0
    %393 = vmatpush1.bf16.msra.mxu0 0
    %394 = vmatprep.subr.bf16.mxu0 0
    %395 = vmatpush1.bf16.msra.mxu0 0
    %396 = vmatprep.subr.bf16.mxu0 0
    %397 = vmatpush1.bf16.msra.mxu0 0
    %398 = vmatprep.subr.bf16.mxu0 0
    %399 = vmatpush1.bf16.msra.mxu0 0
    %400 = vmatprep.subr.bf16.mxu0 0
    %401 = vmatpush1.bf16.msra.mxu0 0
    %402 = vmatprep.mubr.bf16.mxu0 0
    %403 = vmatmul.mubr.bf16.gmra.mrb[0].mxu0 %v368
    %v404 = vpop.f32.mrb[0].mxu0
    %v405 = vadd.f32 %v353, %v404
    %v406 = vpop.f32.mrb[0].mxu0
    %v407 = vpop.f32.mrb[0].mxu0
    %v408 = vadd.f32 %v353, %v407
    %v409 = vpop.f32.mrb[0].mxu0
    %410 = vdwg.mxu0
    %v411 = vld [vmem:[%s11] sm:$0xf]
    %v412 = vld [vmem:[%s11 + $0x4] sm:$0xf]
    %v413 = vld [vmem:[%s11 + $0x8] sm:$0xf]
    %v414 = vld [vmem:[%s11 + $0xc] sm:$0xf]
    %v415 = vld [vmem:[%s12] sm:$0x1]
    %v417 = vlaneseq
    %v418 = vshrl.u32 %v417, 7
    %v419 = vsub.s32 0, %v418
    %v420 = vrot.slane %v415, %v419
    %v426 = vunpack.c.l.b16 %v411
    %v427 = vunpack.c.l.b16 %v412
    %v428 = vunpack.c.l.b16 %v413
    %v429 = vunpack.c.l.b16 %v414
    %v430 = vpack.c.b16 %v427, %v426
    %v431 = vpack.c.b16 %v429, %v428
    %434 = vmatprep.subr.bf16.mxu0 0
    %435 = vmatpush1.bf16.msra.mxu0 %v430
    %436 = vmatprep.subr.bf16.mxu0 0
    %437 = vmatpush1.bf16.msra.mxu0 %v431
    %438 = vmatprep.subr.bf16.mxu0 0
    %439 = vmatpush1.bf16.msra.mxu0 0
    %440 = vmatprep.subr.bf16.mxu0 0
    %441 = vmatpush1.bf16.msra.mxu0 0
    %442 = vmatprep.subr.bf16.mxu0 0
    %443 = vmatpush1.bf16.msra.mxu0 0
    %444 = vmatprep.subr.bf16.mxu0 0
    %445 = vmatpush1.bf16.msra.mxu0 0
    %446 = vmatprep.subr.bf16.mxu0 0
    %447 = vmatpush1.bf16.msra.mxu0 0
    %448 = vmatprep.subr.bf16.mxu0 0
    %449 = vmatpush1.bf16.msra.mxu0 0
    %450 = vmatprep.subr.bf16.mxu0 0
    %451 = vmatpush1.bf16.msra.mxu0 0
    %452 = vmatprep.subr.bf16.mxu0 0
    %453 = vmatpush1.bf16.msra.mxu0 0
    %454 = vmatprep.subr.bf16.mxu0 0
    %455 = vmatpush1.bf16.msra.mxu0 0
    %456 = vmatprep.subr.bf16.mxu0 0
    %457 = vmatpush1.bf16.msra.mxu0 0
    %458 = vmatprep.subr.bf16.mxu0 0
    %459 = vmatpush1.bf16.msra.mxu0 0
    %460 = vmatprep.subr.bf16.mxu0 0
    %461 = vmatpush1.bf16.msra.mxu0 0
    %462 = vmatprep.subr.bf16.mxu0 0
    %463 = vmatpush1.bf16.msra.mxu0 0
    %464 = vmatprep.subr.bf16.mxu0 0
    %465 = vmatpush1.bf16.msra.mxu0 0
    %466 = vmatprep.mubr.bf16.mxu0 0
    %467 = vmatmul.mubr.bf16.gmra.mrb[0].mxu0 %v368
    %v468 = vpop.f32.mrb[0].mxu0
    %v469 = vadd.f32 %v420, %v468
    %v470 = vpop.f32.mrb[0].mxu0
    %v471 = vpop.f32.mrb[0].mxu0
    %v472 = vadd.f32 %v420, %v471
    %v473 = vpop.f32.mrb[0].mxu0
    %474 = vdwg.mxu0
    %v475 = vld [vmem:[%s13] sm:$0xf]
    %v476 = vld [vmem:[%s13 + $0x4] sm:$0xf]
    %v477 = vld [vmem:[%s13 + $0x8] sm:$0xf]
    %v478 = vld [vmem:[%s13 + $0xc] sm:$0xf]
    %v479 = vld [vmem:[%s14] sm:$0x1]
    %v481 = vlaneseq
    %v482 = vshrl.u32 %v481, 7
    %v483 = vsub.s32 0, %v482
    %v484 = vrot.slane %v479, %v483
    %v490 = vunpack.c.l.b16 %v475
    %v491 = vunpack.c.l.b16 %v476
    %v492 = vunpack.c.l.b16 %v477
    %v493 = vunpack.c.l.b16 %v478
    %v494 = vpack.c.b16 %v491, %v490
    %v495 = vpack.c.b16 %v493, %v492
    %498 = vmatprep.subr.bf16.mxu0 0
    %499 = vmatpush1.bf16.msra.mxu0 %v494
    %500 = vmatprep.subr.bf16.mxu0 0
    %501 = vmatpush1.bf16.msra.mxu0 %v495
    %502 = vmatprep.subr.bf16.mxu0 0
    %503 = vmatpush1.bf16.msra.mxu0 0
    %504 = vmatprep.subr.bf16.mxu0 0
    %505 = vmatpush1.bf16.msra.mxu0 0
    %506 = vmatprep.subr.bf16.mxu0 0
    %507 = vmatpush1.bf16.msra.mxu0 0
    %508 = vmatprep.subr.bf16.mxu0 0
    %509 = vmatpush1.bf16.msra.mxu0 0
    %510 = vmatprep.subr.bf16.mxu0 0
    %511 = vmatpush1.bf16.msra.mxu0 0
    %512 = vmatprep.subr.bf16.mxu0 0
    %513 = vmatpush1.bf16.msra.mxu0 0
    %514 = vmatprep.subr.bf16.mxu0 0
    %515 = vmatpush1.bf16.msra.mxu0 0
    %516 = vmatprep.subr.bf16.mxu0 0
    %517 = vmatpush1.bf16.msra.mxu0 0
    %518 = vmatprep.subr.bf16.mxu0 0
    %519 = vmatpush1.bf16.msra.mxu0 0
    %520 = vmatprep.subr.bf16.mxu0 0
    %521 = vmatpush1.bf16.msra.mxu0 0
    %522 = vmatprep.subr.bf16.mxu0 0
    %523 = vmatpush1.bf16.msra.mxu0 0
    %524 = vmatprep.subr.bf16.mxu0 0
    %525 = vmatpush1.bf16.msra.mxu0 0
    %526 = vmatprep.subr.bf16.mxu0 0
    %527 = vmatpush1.bf16.msra.mxu0 0
    %528 = vmatprep.subr.bf16.mxu0 0
    %529 = vmatpush1.bf16.msra.mxu0 0
    %530 = vmatprep.mubr.bf16.mxu0 0
    %531 = vmatmul.mubr.bf16.gmra.mrb[0].mxu0 %v368
    %v532 = vpop.f32.mrb[0].mxu0
    %v533 = vadd.f32 %v484, %v532
    %v534 = vpop.f32.mrb[0].mxu0
    %v535 = vpop.f32.mrb[0].mxu0
    %v536 = vadd.f32 %v484, %v535
    %v537 = vpop.f32.mrb[0].mxu0
    %538 = vdwg.mxu0
    %v539 = vmul.f32 %v469, %v325
    %v540 = vmul.f32 %v472, %v326
    %v541 = vmul.f32 %v469, %v327
    %v542 = vmul.f32 %v472, %v328
    %v543 = vmul.f32 %v469, %v329
    %v544 = vmul.f32 %v472, %v330
    %v545 = vmul.f32 %v469, %v331
    %v546 = vmul.f32 %v472, %v332
    %v547 = vpack.c.bf16 %v540, %v539
    %v548 = vpack.c.bf16 %v542, %v541
    %v549 = vpack.c.bf16 %v544, %v543
    %v550 = vpack.c.bf16 %v546, %v545
    %v551 = vmul.f32 %v533, %v325
    %v552 = vmul.f32 %v536, %v326
    %v553 = vmul.f32 %v533, %v327
    %v554 = vmul.f32 %v536, %v328
    %v555 = vmul.f32 %v533, %v329
    %v556 = vmul.f32 %v536, %v330
    %v557 = vmul.f32 %v533, %v331
    %v558 = vmul.f32 %v536, %v332
    %v559 = vpack.c.bf16 %v552, %v551
    %v560 = vpack.c.bf16 %v554, %v553
    %v561 = vpack.c.bf16 %v556, %v555
    %v562 = vpack.c.bf16 %v558, %v557
    %v563 = vpack.c.bf16 %v408, %v405
    %v564 = vlaneseq
    %v565 = vshrl.u32 %v564, 7
    %v566 = vsub.s32 0, %v565
    %v567 = vrot.slane %v324, %v566
    %v569 = vsel %vm259, %v563, 0
    %v572 = vsel %vm259, %v547, 0
    %v575 = vsel %vm259, %v548, 0
    %v578 = vsel %vm259, %v549, 0
    %v581 = vsel %vm259, %v550, 0
    %583 = vmatprep.subr.bf16.mxu0 0
    %584 = vmatpush1.bf16.xpose.msra.mxu0 %v572
    %585 = vmatprep.subr.bf16.mxu0 0
    %586 = vmatpush1.bf16.xpose.msra.mxu0 %v575
    %587 = vmatprep.subr.bf16.mxu0 0
    %588 = vmatpush1.bf16.xpose.msra.mxu0 %v578
    %589 = vmatprep.subr.bf16.mxu0 0
    %590 = vmatpush1.bf16.xpose.msra.mxu0 %v581
    %591 = vmatprep.subr.bf16.mxu0 0
    %592 = vmatpush1.bf16.xpose.msra.mxu0 0
    %593 = vmatprep.subr.bf16.mxu0 0
    %594 = vmatpush1.bf16.xpose.msra.mxu0 0
    %595 = vmatprep.subr.bf16.mxu0 0
    %596 = vmatpush1.bf16.xpose.msra.mxu0 0
    %597 = vmatprep.subr.bf16.mxu0 0
    %598 = vmatpush1.bf16.xpose.msra.mxu0 0
    %599 = vmatprep.subr.bf16.mxu0 0
    %600 = vmatpush1.bf16.xpose.msra.mxu0 0
    %601 = vmatprep.subr.bf16.mxu0 0
    %602 = vmatpush1.bf16.xpose.msra.mxu0 0
    %603 = vmatprep.subr.bf16.mxu0 0
    %604 = vmatpush1.bf16.xpose.msra.mxu0 0
    %605 = vmatprep.subr.bf16.mxu0 0
    %606 = vmatpush1.bf16.xpose.msra.mxu0 0
    %607 = vmatprep.subr.bf16.mxu0 0
    %608 = vmatpush1.bf16.xpose.msra.mxu0 0
    %609 = vmatprep.subr.bf16.mxu0 0
    %610 = vmatpush1.bf16.xpose.msra.mxu0 0
    %611 = vmatprep.subr.bf16.mxu0 0
    %612 = vmatpush1.bf16.xpose.msra.mxu0 0
    %613 = vmatprep.subr.bf16.mxu0 0
    %614 = vmatpush1.bf16.xpose.msra.mxu0 0
    %615 = vmatprep.mubr.bf16.mxu0 0
    %616 = vmatmul.mubr.bf16.gmra.mrb[0].mxu0 %v569
    %v617 = vpop.f32.mrb[0].mxu0
    %v618 = vadd.f32 %v567, %v617
    %v619 = vpop.f32.mrb[0].mxu0
    %v620 = vpop.f32.mrb[0].mxu0
    %v621 = vadd.f32 %v567, %v620
    %v622 = vpop.f32.mrb[0].mxu0
    %623 = vdwg.mxu0
    %vm624 = vcmask 523264
    %v625 = vsel %vm624, %v618, -inf
    %626 = vmax.xlane.f32.xlu0 %v625
    %v627 = vpop.xlane.xlu0 %626
    %v628 = vsel %vm624, %v621, -inf
    %629 = vmax.xlane.f32.xlu0 %v628
    %v630 = vpop.xlane.xlu0 %629
    %v631 = vsub.f32 %v618, %v627
    %v632 = vsub.f32 %v621, %v630
    %v633 = vmul.f32 %v631, 1.442695
    %v634 = vpow.pop %v633
    %v635 = vmul.f32 %v632, 1.442695
    %v636 = vpow.pop %v635
    %v637 = vpack.c.bf16 %v636, %v634
    %v646 = vunpack.c.l.b16 %v335
    %v647 = vunpack.c.l.b16 %v336
    %v648 = vunpack.c.l.b16 %v337
    %v649 = vunpack.c.l.b16 %v338
    %v650 = vunpack.c.l.b16 %v339
    %v651 = vunpack.c.l.b16 %v340
    %v652 = vunpack.c.l.b16 %v341
    %v653 = vunpack.c.l.b16 %v342
    %v654 = vpack.c.b16 %v647, %v646
    %v655 = vpack.c.b16 %v649, %v648
    %v656 = vpack.c.b16 %v651, %v650
    %v657 = vpack.c.b16 %v653, %v652
    %v663 = vsel %vm624, %v637, 0
    %665 = vmatprep.subr.bf16.mxu0 0
    %666 = vmatpush1.bf16.msra.mxu0 %v654
    %667 = vmatprep.subr.bf16.mxu0 0
    %668 = vmatpush1.bf16.msra.mxu0 %v655
    %669 = vmatprep.subr.bf16.mxu0 0
    %670 = vmatpush1.bf16.msra.mxu0 %v656
    %671 = vmatprep.subr.bf16.mxu0 0
    %672 = vmatpush1.bf16.msra.mxu0 %v657
    %673 = vmatprep.subr.bf16.mxu0 0
    %674 = vmatpush1.bf16.msra.mxu0 0
    %675 = vmatprep.subr.bf16.mxu0 0
    %676 = vmatpush1.bf16.msra.mxu0 0
    %677 = vmatprep.subr.bf16.mxu0 0
    %678 = vmatpush1.bf16.msra.mxu0 0
    %679 = vmatprep.subr.bf16.mxu0 0
    %680 = vmatpush1.bf16.msra.mxu0 0
    %681 = vmatprep.subr.bf16.mxu0 0
    %682 = vmatpush1.bf16.msra.mxu0 0
    %683 = vmatprep.subr.bf16.mxu0 0
    %684 = vmatpush1.bf16.msra.mxu0 0
    %685 = vmatprep.subr.bf16.mxu0 0
    %686 = vmatpush1.bf16.msra.mxu0 0
    %687 = vmatprep.subr.bf16.mxu0 0
    %688 = vmatpush1.bf16.msra.mxu0 0
    %689 = vmatprep.subr.bf16.mxu0 0
    %690 = vmatpush1.bf16.msra.mxu0 0
    %691 = vmatprep.subr.bf16.mxu0 0
    %692 = vmatpush1.bf16.msra.mxu0 0
    %693 = vmatprep.subr.bf16.mxu0 0
    %694 = vmatpush1.bf16.msra.mxu0 0
    %695 = vmatprep.subr.bf16.mxu0 0
    %696 = vmatpush1.bf16.msra.mxu0 0
    %697 = vmatprep.mubr.bf16.mxu0 0
    %698 = vmatmul.mubr.bf16.gmra.mrb[0].mxu0 %v663
    %v699 = vpop.f32.mrb[0].mxu0
    %v700 = vadd.f32 0.0, %v699
    %v701 = vpop.f32.mrb[0].mxu0
    %v702 = vpop.f32.mrb[0].mxu0
    %v703 = vadd.f32 0.0, %v702
    %v704 = vpop.f32.mrb[0].mxu0
    %705 = vdwg.mxu0
    %v706 = vrcp.pop %v700
    %v707 = vrcp.pop %v703
    %v708 = vmul.f32 %v634, %v706
    %v709 = vmul.f32 %v636, %v707
    %v710 = vmul.f32 %v708, %v333
    %v711 = vmul.f32 %v709, %v334
    %v712 = vpack.c.bf16 %v711, %v710
    %v714 = vsel %vm624, %v712, 0
    %716 = vmatprep.subr.bf16.mxu0 0
    %717 = vmatpush1.bf16.msra.mxu0 %v559
    %718 = vmatprep.subr.bf16.mxu0 0
    %719 = vmatpush1.bf16.msra.mxu0 %v560
    %720 = vmatprep.subr.bf16.mxu0 0
    %721 = vmatpush1.bf16.msra.mxu0 %v561
    %722 = vmatprep.subr.bf16.mxu0 0
    %723 = vmatpush1.bf16.msra.mxu0 %v562
    %724 = vmatprep.subr.bf16.mxu0 0
    %725 = vmatpush1.bf16.msra.mxu0 0
    %726 = vmatprep.subr.bf16.mxu0 0
    %727 = vmatpush1.bf16.msra.mxu0 0
    %728 = vmatprep.subr.bf16.mxu0 0
    %729 = vmatpush1.bf16.msra.mxu0 0
    %730 = vmatprep.subr.bf16.mxu0 0
    %731 = vmatpush1.bf16.msra.mxu0 0
    %732 = vmatprep.subr.bf16.mxu0 0
    %733 = vmatpush1.bf16.msra.mxu0 0
    %734 = vmatprep.subr.bf16.mxu0 0
    %735 = vmatpush1.bf16.msra.mxu0 0
    %736 = vmatprep.subr.bf16.mxu0 0
    %737 = vmatpush1.bf16.msra.mxu0 0
    %738 = vmatprep.subr.bf16.mxu0 0
    %739 = vmatpush1.bf16.msra.mxu0 0
    %740 = vmatprep.subr.bf16.mxu0 0
    %741 = vmatpush1.bf16.msra.mxu0 0
    %742 = vmatprep.subr.bf16.mxu0 0
    %743 = vmatpush1.bf16.msra.mxu0 0
    %744 = vmatprep.subr.bf16.mxu0 0
    %745 = vmatpush1.bf16.msra.mxu0 0
    %746 = vmatprep.subr.bf16.mxu0 0
    %747 = vmatpush1.bf16.msra.mxu0 0
    %748 = vmatprep.mubr.bf16.mxu0 0
    %749 = vmatmul.mubr.bf16.gmra.mrb[0].mxu0 %v714
    %v750 = vpop.f32.mrb[0].mxu0
    %v751 = vadd.f32 0.0, %v750
    %v752 = vpop.f32.mrb[0].mxu0
    %v753 = vpop.f32.mrb[0].mxu0
    %v754 = vadd.f32 0.0, %v753
    %v755 = vpop.f32.mrb[0].mxu0
    %756 = vdwg.mxu0
    %v757 = vpack.c.bf16 %v754, %v751
    %v758 = vld [vmem:[%s15] sm:$0xf]
    %v759 = vld [vmem:[%s15 + $0x4] sm:$0xf]
    %v760 = vld [vmem:[%s15 + $0x8] sm:$0xf]
    %v761 = vld [vmem:[%s15 + $0xc] sm:$0xf]
    %v762 = vld [vmem:[%s16] sm:$0x1]
    %v764 = vlaneseq
    %v765 = vshrl.u32 %v764, 7
    %v766 = vsub.s32 0, %v765
    %v767 = vrot.slane %v762, %v766
    %v773 = vunpack.c.l.b16 %v758
    %v774 = vunpack.c.l.b16 %v759
    %v775 = vunpack.c.l.b16 %v760
    %v776 = vunpack.c.l.b16 %v761
    %v777 = vpack.c.b16 %v774, %v773
    %v778 = vpack.c.b16 %v776, %v775
    %v782 = vsel %vm259, %v757, 0
    %784 = vmatprep.subr.bf16.mxu0 0
    %785 = vmatpush1.bf16.msra.mxu0 %v777
    %786 = vmatprep.subr.bf16.mxu0 0
    %787 = vmatpush1.bf16.msra.mxu0 %v778
    %788 = vmatprep.subr.bf16.mxu0 0
    %789 = vmatpush1.bf16.msra.mxu0 0
    %790 = vmatprep.subr.bf16.mxu0 0
    %791 = vmatpush1.bf16.msra.mxu0 0
    %792 = vmatprep.subr.bf16.mxu0 0
    %793 = vmatpush1.bf16.msra.mxu0 0
    %794 = vmatprep.subr.bf16.mxu0 0
    %795 = vmatpush1.bf16.msra.mxu0 0
    %796 = vmatprep.subr.bf16.mxu0 0
    %797 = vmatpush1.bf16.msra.mxu0 0
    %798 = vmatprep.subr.bf16.mxu0 0
    %799 = vmatpush1.bf16.msra.mxu0 0
    %800 = vmatprep.subr.bf16.mxu0 0
    %801 = vmatpush1.bf16.msra.mxu0 0
    %802 = vmatprep.subr.bf16.mxu0 0
    %803 = vmatpush1.bf16.msra.mxu0 0
    %804 = vmatprep.subr.bf16.mxu0 0
    %805 = vmatpush1.bf16.msra.mxu0 0
    %806 = vmatprep.subr.bf16.mxu0 0
    %807 = vmatpush1.bf16.msra.mxu0 0
    %808 = vmatprep.subr.bf16.mxu0 0
    %809 = vmatpush1.bf16.msra.mxu0 0
    %810 = vmatprep.subr.bf16.mxu0 0
    %811 = vmatpush1.bf16.msra.mxu0 0
    %812 = vmatprep.subr.bf16.mxu0 0
    %813 = vmatpush1.bf16.msra.mxu0 0
    %814 = vmatprep.subr.bf16.mxu0 0
    %815 = vmatpush1.bf16.msra.mxu0 0
    %816 = vmatprep.mubr.bf16.mxu0 0
    %817 = vmatmul.mubr.bf16.gmra.mrb[0].mxu0 %v782
    %v818 = vpop.f32.mrb[0].mxu0
    %v819 = vadd.f32 %v767, %v818
    %v820 = vpop.f32.mrb[0].mxu0
    %v821 = vpop.f32.mrb[0].mxu0
    %v822 = vadd.f32 %v767, %v821
    %v823 = vpop.f32.mrb[0].mxu0
    %824 = vdwg.mxu0
    %v825 = vadd.f32 %v301, %v819
    %v826 = vadd.f32 %v302, %v822
    %v827 = vld [vmem:[%s17] sm:$0x1]
    %v828 = vld [vmem:[%s18] sm:$0x1]
    %v829 = vsel %vm259, %v825, 0.0
    %830 = vadd.xlane.f32.xlu0 %v829
    %v831 = vpop.xlane.xlu0 %830
    %v832 = vsel %vm259, %v826, 0.0
    %833 = vadd.xlane.f32.xlu0 %v832
    %v834 = vpop.xlane.xlu0 %833
    %v835 = vmul.f32 %v831, %v266
    %v836 = vmul.f32 %v834, %v266
    %v837 = vsub.f32 %v825, %v835
    %v838 = vsub.f32 %v826, %v836
    %v839 = vmul.f32 %v837, %v837
    %v840 = vmul.f32 %v838, %v838
    %v841 = vsel %vm259, %v839, 0.0
    %842 = vadd.xlane.f32.xlu0 %v841
    %v843 = vpop.xlane.xlu0 %842
    %v844 = vsel %vm259, %v840, 0.0
    %845 = vadd.xlane.f32.xlu0 %v844
    %v846 = vpop.xlane.xlu0 %845
    %v847 = vmul.f32 %v843, %v266
    %v848 = vmul.f32 %v846, %v266
    %v849 = vadd.f32 %v847, 1e-12
    %v850 = vadd.f32 %v848, 1e-12
    %v851 = vrsqrt.pop %v849
    %v852 = vrsqrt.pop %v850
    %v853 = vmul.f32 %v837, %v851
    %v854 = vmul.f32 %v838, %v852
    %v856 = vlaneseq
    %v857 = vshrl.u32 %v856, 7
    %v858 = vsub.s32 0, %v857
    %v859 = vrot.slane %v827, %v858
    %v861 = vmul.f32 %v853, %v859
    %v862 = vmul.f32 %v854, %v859
    %v864 = vlaneseq
    %v865 = vshrl.u32 %v864, 7
    %v866 = vsub.s32 0, %v865
    %v867 = vrot.slane %v828, %v866
    %v869 = vadd.f32 %v861, %v867
    %v870 = vadd.f32 %v862, %v867
    %v871 = vpack.c.bf16 %v870, %v869
    %v872 = vld [vmem:[%s19] sm:$0xf]
    %v873 = vld [vmem:[%s19 + $0x4] sm:$0xf]
    %v874 = vld [vmem:[%s19 + $0x8] sm:$0xf]
    %v875 = vld [vmem:[%s19 + $0xc] sm:$0xf]
    %v876 = vld [vmem:[%s20] sm:$0x1]
    %v878 = vlaneseq
    %v879 = vshrl.u32 %v878, 7
    %v880 = vsub.s32 0, %v879
    %v881 = vrot.slane %v876, %v880
    %v887 = vunpack.c.l.b16 %v872
    %v888 = vunpack.c.l.b16 %v873
    %v889 = vunpack.c.l.b16 %v874
    %v890 = vunpack.c.l.b16 %v875
    %v891 = vpack.c.b16 %v888, %v887
    %v892 = vpack.c.b16 %v890, %v889
    %v896 = vsel %vm259, %v871, 0
    %898 = vmatprep.subr.bf16.mxu0 0
    %899 = vmatpush1.bf16.msra.mxu0 %v891
    %900 = vmatprep.subr.bf16.mxu0 0
    %901 = vmatpush1.bf16.msra.mxu0 %v892
    %902 = vmatprep.subr.bf16.mxu0 0
    %903 = vmatpush1.bf16.msra.mxu0 0
    %904 = vmatprep.subr.bf16.mxu0 0
    %905 = vmatpush1.bf16.msra.mxu0 0
    %906 = vmatprep.subr.bf16.mxu0 0
    %907 = vmatpush1.bf16.msra.mxu0 0
    %908 = vmatprep.subr.bf16.mxu0 0
    %909 = vmatpush1.bf16.msra.mxu0 0
    %910 = vmatprep.subr.bf16.mxu0 0
    %911 = vmatpush1.bf16.msra.mxu0 0
    %912 = vmatprep.subr.bf16.mxu0 0
    %913 = vmatpush1.bf16.msra.mxu0 0
    %914 = vmatprep.subr.bf16.mxu0 0
    %915 = vmatpush1.bf16.msra.mxu0 0
    %916 = vmatprep.subr.bf16.mxu0 0
    %917 = vmatpush1.bf16.msra.mxu0 0
    %918 = vmatprep.subr.bf16.mxu0 0
    %919 = vmatpush1.bf16.msra.mxu0 0
    %920 = vmatprep.subr.bf16.mxu0 0
    %921 = vmatpush1.bf16.msra.mxu0 0
    %922 = vmatprep.subr.bf16.mxu0 0
    %923 = vmatpush1.bf16.msra.mxu0 0
    %924 = vmatprep.subr.bf16.mxu0 0
    %925 = vmatpush1.bf16.msra.mxu0 0
    %926 = vmatprep.subr.bf16.mxu0 0
    %927 = vmatpush1.bf16.msra.mxu0 0
    %928 = vmatprep.subr.bf16.mxu0 0
    %929 = vmatpush1.bf16.msra.mxu0 0
    %930 = vmatprep.mubr.bf16.mxu0 0
    %931 = vmatmul.mubr.bf16.gmra.mrb[0].mxu0 %v896
    %v932 = vpop.f32.mrb[0].mxu0
    %v933 = vadd.f32 %v881, %v932
    %v934 = vpop.f32.mrb[0].mxu0
    %v935 = vpop.f32.mrb[0].mxu0
    %v936 = vadd.f32 %v881, %v935
    %v937 = vpop.f32.mrb[0].mxu0
    %938 = vdwg.mxu0
    %v939 = vmul.f32 %v933, 0.5
    %v940 = vmul.f32 %v936, 0.5
    %v941 = vmul.f32 %v933, 0.044715
    %v942 = vmul.f32 %v936, 0.044715
    %v943 = vmul.f32 %v941, %v933
    %v944 = vmul.f32 %v942, %v936
    %v945 = vmul.f32 %v943, %v933
    %v946 = vmul.f32 %v944, %v936
    %v947 = vadd.f32 %v933, %v945
    %v948 = vadd.f32 %v936, %v946
    %v949 = vmul.f32 %v947, 0.7978846
    %v950 = vmul.f32 %v948, 0.7978846
    %v951 = vtanh.pop %v949
    %v952 = vtanh.pop %v950
    %v953 = vadd.f32 %v951, 1.0
    %v954 = vadd.f32 %v952, 1.0
    %v955 = vmul.f32 %v939, %v953
    %v956 = vmul.f32 %v940, %v954
    %v957 = vpack.c.bf16 %v956, %v955
    %v958 = vld [vmem:[%s21] sm:$0xf]
    %v959 = vld [vmem:[%s21 + $0x4] sm:$0xf]
    %v960 = vld [vmem:[%s21 + $0x8] sm:$0xf]
    %v961 = vld [vmem:[%s21 + $0xc] sm:$0xf]
    %v962 = vld [vmem:[%s21 + $0x10] sm:$0xf]
    %v963 = vld [vmem:[%s21 + $0x14] sm:$0xf]
    %v964 = vld [vmem:[%s21 + $0x18] sm:$0xf]
    %v965 = vld [vmem:[%s21 + $0x1c] sm:$0xf]
    %v966 = vld [vmem:[%s22] sm:$0x1]
    %v968 = vlaneseq
    %v969 = vshrl.u32 %v968, 7
    %v970 = vsub.s32 0, %v969
    %v971 = vrot.slane %v966, %v970
    %v981 = vunpack.c.l.b16 %v958
    %v982 = vunpack.c.l.b16 %v959
    %v983 = vunpack.c.l.b16 %v960
    %v984 = vunpack.c.l.b16 %v961
    %v985 = vunpack.c.l.b16 %v962
    %v986 = vunpack.c.l.b16 %v963
    %v987 = vunpack.c.l.b16 %v964
    %v988 = vunpack.c.l.b16 %v965
    %v989 = vpack.c.b16 %v982, %v981
    %v990 = vpack.c.b16 %v984, %v983
    %v991 = vpack.c.b16 %v986, %v985
    %v992 = vpack.c.b16 %v988, %v987
    %v998 = vsel %vm624, %v957, 0
    %1000 = vmatprep.subr.bf16.mxu0 0
    %1001 = vmatpush1.bf16.msra.mxu0 %v989
    %1002 = vmatprep.subr.bf16.mxu0 0
    %1003 = vmatpush1.bf16.msra.mxu0 %v990
    %1004 = vmatprep.subr.bf16.mxu0 0
    %1005 = vmatpush1.bf16.msra.mxu0 %v991
    %1006 = vmatprep.subr.bf16.mxu0 0
    %1007 = vmatpush1.bf16.msra.mxu0 %v992
    %1008 = vmatprep.subr.bf16.mxu0 0
    %1009 = vmatpush1.bf16.msra.mxu0 0
    %1010 = vmatprep.subr.bf16.mxu0 0
    %1011 = vmatpush1.bf16.msra.mxu0 0
    %1012 = vmatprep.subr.bf16.mxu0 0
    %1013 = vmatpush1.bf16.msra.mxu0 0
    %1014 = vmatprep.subr.bf16.mxu0 0
    %1015 = vmatpush1.bf16.msra.mxu0 0
    %1016 = vmatprep.subr.bf16.mxu0 0
    %1017 = vmatpush1.bf16.msra.mxu0 0
    %1018 = vmatprep.subr.bf16.mxu0 0
    %1019 = vmatpush1.bf16.msra.mxu0 0
    %1020 = vmatprep.subr.bf16.mxu0 0
    %1021 = vmatpush1.bf16.msra.mxu0 0
    %1022 = vmatprep.subr.bf16.mxu0 0
    %1023 = vmatpush1.bf16.msra.mxu0 0
    %1024 = vmatprep.subr.bf16.mxu0 0
    %1025 = vmatpush1.bf16.msra.mxu0 0
    %1026 = vmatprep.subr.bf16.mxu0 0
    %1027 = vmatpush1.bf16.msra.mxu0 0
    %1028 = vmatprep.subr.bf16.mxu0 0
    %1029 = vmatpush1.bf16.msra.mxu0 0
    %1030 = vmatprep.subr.bf16.mxu0 0
    %1031 = vmatpush1.bf16.msra.mxu0 0
    %1032 = vmatprep.mubr.bf16.mxu0 0
    %1033 = vmatmul.mubr.bf16.gmra.mrb[0].mxu0 %v998
    %v1034 = vpop.f32.mrb[0].mxu0
    %v1035 = vadd.f32 %v971, %v1034
    %v1036 = vpop.f32.mrb[0].mxu0
    %v1037 = vpop.f32.mrb[0].mxu0
    %v1038 = vadd.f32 %v971, %v1037
    %v1039 = vpop.f32.mrb[0].mxu0
    %1040 = vdwg.mxu0
    %v1041 = vadd.f32 %v869, %v1035
    %v1042 = vadd.f32 %v870, %v1038
    %v1043 = vld [vmem:[%s23] sm:$0x1]
    %v1044 = vld [vmem:[%s24] sm:$0x1]
    %v1045 = vsel %vm259, %v1041, 0.0
    %1046 = vadd.xlane.f32.xlu0 %v1045
    %v1047 = vpop.xlane.xlu0 %1046
    %v1048 = vsel %vm259, %v1042, 0.0
    %1049 = vadd.xlane.f32.xlu0 %v1048
    %v1050 = vpop.xlane.xlu0 %1049
    %v1051 = vmul.f32 %v1047, %v266
    %v1052 = vmul.f32 %v1050, %v266
    %v1053 = vsub.f32 %v1041, %v1051
    %v1054 = vsub.f32 %v1042, %v1052
    %v1055 = vmul.f32 %v1053, %v1053
    %v1056 = vmul.f32 %v1054, %v1054
    %v1057 = vsel %vm259, %v1055, 0.0
    %1058 = vadd.xlane.f32.xlu0 %v1057
    %v1059 = vpop.xlane.xlu0 %1058
    %v1060 = vsel %vm259, %v1056, 0.0
    %1061 = vadd.xlane.f32.xlu0 %v1060
    %v1062 = vpop.xlane.xlu0 %1061
    %v1063 = vmul.f32 %v1059, %v266
    %v1064 = vmul.f32 %v1062, %v266
    %v1065 = vadd.f32 %v1063, 1e-12
    %v1066 = vadd.f32 %v1064, 1e-12
    %v1067 = vrsqrt.pop %v1065
    %v1068 = vrsqrt.pop %v1066
    %v1069 = vmul.f32 %v1053, %v1067
    %v1070 = vmul.f32 %v1054, %v1068
    %v1072 = vlaneseq
    %v1073 = vshrl.u32 %v1072, 7
    %v1074 = vsub.s32 0, %v1073
    %v1075 = vrot.slane %v1043, %v1074
    %v1077 = vmul.f32 %v1069, %v1075
    %v1078 = vmul.f32 %v1070, %v1075
    %v1080 = vlaneseq
    %v1081 = vshrl.u32 %v1080, 7
    %v1082 = vsub.s32 0, %v1081
    %v1083 = vrot.slane %v1044, %v1082
    %v1085 = vadd.f32 %v1077, %v1083
    %v1086 = vadd.f32 %v1078, %v1083
    %v1087 = vpack.c.bf16 %v1086, %v1085
    %s1088 = scalar_lea.vmem %s9, 16
    %v1089 = vld [vmem:[%s1088] sm:$0xf]
    %v1090 = vld [vmem:[%s1088 + $0x4] sm:$0xf]
    %v1091 = vld [vmem:[%s1088 + $0x8] sm:$0xf]
    %v1092 = vld [vmem:[%s1088 + $0xc] sm:$0xf]
    %s1093 = scalar_lea.vmem %s10, 1
    %v1094 = vld [vmem:[%s1093] sm:$0x1]
    %v1096 = vlaneseq
    %v1097 = vshrl.u32 %v1096, 7
    %v1098 = vsub.s32 0, %v1097
    %v1099 = vrot.slane %v1094, %v1098
    %v1105 = vunpack.c.l.b16 %v1089
    %v1106 = vunpack.c.l.b16 %v1090
    %v1107 = vunpack.c.l.b16 %v1091
    %v1108 = vunpack.c.l.b16 %v1092
    %v1109 = vpack.c.b16 %v1106, %v1105
    %v1110 = vpack.c.b16 %v1108, %v1107
    %v1114 = vsel %vm259, %v1087, 0
    %1116 = vmatprep.subr.bf16.mxu0 0
    %1117 = vmatpush1.bf16.msra.mxu0 %v1109
    %1118 = vmatprep.subr.bf16.mxu0 0
    %1119 = vmatpush1.bf16.msra.mxu0 %v1110
    %1120 = vmatprep.subr.bf16.mxu0 0
    %1121 = vmatpush1.bf16.msra.mxu0 0
    %1122 = vmatprep.subr.bf16.mxu0 0
    %1123 = vmatpush1.bf16.msra.mxu0 0
    %1124 = vmatprep.subr.bf16.mxu0 0
    %1125 = vmatpush1.bf16.msra.mxu0 0
    %1126 = vmatprep.subr.bf16.mxu0 0
    %1127 = vmatpush1.bf16.msra.mxu0 0
    %1128 = vmatprep.subr.bf16.mxu0 0
    %1129 = vmatpush1.bf16.msra.mxu0 0
    %1130 = vmatprep.subr.bf16.mxu0 0
    %1131 = vmatpush1.bf16.msra.mxu0 0
    %1132 = vmatprep.subr.bf16.mxu0 0
    %1133 = vmatpush1.bf16.msra.mxu0 0
    %1134 = vmatprep.subr.bf16.mxu0 0
    %1135 = vmatpush1.bf16.msra.mxu0 0
    %1136 = vmatprep.subr.bf16.mxu0 0
    %1137 = vmatpush1.bf16.msra.mxu0 0
    %1138 = vmatprep.subr.bf16.mxu0 0
    %1139 = vmatpush1.bf16.msra.mxu0 0
    %1140 = vmatprep.subr.bf16.mxu0 0
    %1141 = vmatpush1.bf16.msra.mxu0 0
    %1142 = vmatprep.subr.bf16.mxu0 0
    %1143 = vmatpush1.bf16.msra.mxu0 0
    %1144 = vmatprep.subr.bf16.mxu0 0
    %1145 = vmatpush1.bf16.msra.mxu0 0
    %1146 = vmatprep.subr.bf16.mxu0 0
    %1147 = vmatpush1.bf16.msra.mxu0 0
    %1148 = vmatprep.mubr.bf16.mxu0 0
    %1149 = vmatmul.mubr.bf16.gmra.mrb[0].mxu0 %v1114
    %v1150 = vpop.f32.mrb[0].mxu0
    %v1151 = vadd.f32 %v1099, %v1150
    %v1152 = vpop.f32.mrb[0].mxu0
    %v1153 = vpop.f32.mrb[0].mxu0
    %v1154 = vadd.f32 %v1099, %v1153
    %v1155 = vpop.f32.mrb[0].mxu0
    %1156 = vdwg.mxu0
    %s1157 = scalar_lea.vmem %s11, 16
    %v1158 = vld [vmem:[%s1157] sm:$0xf]
    %v1159 = vld [vmem:[%s1157 + $0x4] sm:$0xf]
    %v1160 = vld [vmem:[%s1157 + $0x8] sm:$0xf]
    %v1161 = vld [vmem:[%s1157 + $0xc] sm:$0xf]
    %s1162 = scalar_lea.vmem %s12, 1
    %v1163 = vld [vmem:[%s1162] sm:$0x1]
    %v1165 = vlaneseq
    %v1166 = vshrl.u32 %v1165, 7
    %v1167 = vsub.s32 0, %v1166
    %v1168 = vrot.slane %v1163, %v1167
    %v1174 = vunpack.c.l.b16 %v1158
    %v1175 = vunpack.c.l.b16 %v1159
    %v1176 = vunpack.c.l.b16 %v1160
    %v1177 = vunpack.c.l.b16 %v1161
    %v1178 = vpack.c.b16 %v1175, %v1174
    %v1179 = vpack.c.b16 %v1177, %v1176
    %1182 = vmatprep.subr.bf16.mxu0 0
    %1183 = vmatpush1.bf16.msra.mxu0 %v1178
    %1184 = vmatprep.subr.bf16.mxu0 0
    %1185 = vmatpush1.bf16.msra.mxu0 %v1179
    %1186 = vmatprep.subr.bf16.mxu0 0
    %1187 = vmatpush1.bf16.msra.mxu0 0
    %1188 = vmatprep.subr.bf16.mxu0 0
    %1189 = vmatpush1.bf16.msra.mxu0 0
    %1190 = vmatprep.subr.bf16.mxu0 0
    %1191 = vmatpush1.bf16.msra.mxu0 0
    %1192 = vmatprep.subr.bf16.mxu0 0
    %1193 = vmatpush1.bf16.msra.mxu0 0
    %1194 = vmatprep.subr.bf16.mxu0 0
    %1195 = vmatpush1.bf16.msra.mxu0 0
    %1196 = vmatprep.subr.bf16.mxu0 0
    %1197 = vmatpush1.bf16.msra.mxu0 0
    %1198 = vmatprep.subr.bf16.mxu0 0
    %1199 = vmatpush1.bf16.msra.mxu0 0
    %1200 = vmatprep.subr.bf16.mxu0 0
    %1201 = vmatpush1.bf16.msra.mxu0 0
    %1202 = vmatprep.subr.bf16.mxu0 0
    %1203 = vmatpush1.bf16.msra.mxu0 0
    %1204 = vmatprep.subr.bf16.mxu0 0
    %1205 = vmatpush1.bf16.msra.mxu0 0
    %1206 = vmatprep.subr.bf16.mxu0 0
    %1207 = vmatpush1.bf16.msra.mxu0 0
    %1208 = vmatprep.subr.bf16.mxu0 0
    %1209 = vmatpush1.bf16.msra.mxu0 0
    %1210 = vmatprep.subr.bf16.mxu0 0
    %1211 = vmatpush1.bf16.msra.mxu0 0
    %1212 = vmatprep.subr.bf16.mxu0 0
    %1213 = vmatpush1.bf16.msra.mxu0 0
    %1214 = vmatprep.mubr.bf16.mxu0 0
    %1215 = vmatmul.mubr.bf16.gmra.mrb[0].mxu0 %v1114
    %v1216 = vpop.f32.mrb[0].mxu0
    %v1217 = vadd.f32 %v1168, %v1216
    %v1218 = vpop.f32.mrb[0].mxu0
    %v1219 = vpop.f32.mrb[0].mxu0
    %v1220 = vadd.f32 %v1168, %v1219
    %v1221 = vpop.f32.mrb[0].mxu0
    %1222 = vdwg.mxu0
    %s1223 = scalar_lea.vmem %s13, 16
    %v1224 = vld [vmem:[%s1223] sm:$0xf]
    %v1225 = vld [vmem:[%s1223 + $0x4] sm:$0xf]
    %v1226 = vld [vmem:[%s1223 + $0x8] sm:$0xf]
    %v1227 = vld [vmem:[%s1223 + $0xc] sm:$0xf]
    %s1228 = scalar_lea.vmem %s14, 1
    %v1229 = vld [vmem:[%s1228] sm:$0x1]
    %v1231 = vlaneseq
    %v1232 = vshrl.u32 %v1231, 7
    %v1233 = vsub.s32 0, %v1232
    %v1234 = vrot.slane %v1229, %v1233
    %v1240 = vunpack.c.l.b16 %v1224
    %v1241 = vunpack.c.l.b16 %v1225
    %v1242 = vunpack.c.l.b16 %v1226
    %v1243 = vunpack.c.l.b16 %v1227
    %v1244 = vpack.c.b16 %v1241, %v1240
    %v1245 = vpack.c.b16 %v1243, %v1242
    %1248 = vmatprep.subr.bf16.mxu0 0
    %1249 = vmatpush1.bf16.msra.mxu0 %v1244
    %1250 = vmatprep.subr.bf16.mxu0 0
    %1251 = vmatpush1.bf16.msra.mxu0 %v1245
    %1252 = vmatprep.subr.bf16.mxu0 0
    %1253 = vmatpush1.bf16.msra.mxu0 0
    %1254 = vmatprep.subr.bf16.mxu0 0
    %1255 = vmatpush1.bf16.msra.mxu0 0
    %1256 = vmatprep.subr.bf16.mxu0 0
    %1257 = vmatpush1.bf16.msra.mxu0 0
    %1258 = vmatprep.subr.bf16.mxu0 0
    %1259 = vmatpush1.bf16.msra.mxu0 0
    %1260 = vmatprep.subr.bf16.mxu0 0
    %1261 = vmatpush1.bf16.msra.mxu0 0
    %1262 = vmatprep.subr.bf16.mxu0 0
    %1263 = vmatpush1.bf16.msra.mxu0 0
    %1264 = vmatprep.subr.bf16.mxu0 0
    %1265 = vmatpush1.bf16.msra.mxu0 0
    %1266 = vmatprep.subr.bf16.mxu0 0
    %1267 = vmatpush1.bf16.msra.mxu0 0
    %1268 = vmatprep.subr.bf16.mxu0 0
    %1269 = vmatpush1.bf16.msra.mxu0 0
    %1270 = vmatprep.subr.bf16.mxu0 0
    %1271 = vmatpush1.bf16.msra.mxu0 0
    %1272 = vmatprep.subr.bf16.mxu0 0
    %1273 = vmatpush1.bf16.msra.mxu0 0
    %1274 = vmatprep.subr.bf16.mxu0 0
    %1275 = vmatpush1.bf16.msra.mxu0 0
    %1276 = vmatprep.subr.bf16.mxu0 0
    %1277 = vmatpush1.bf16.msra.mxu0 0
    %1278 = vmatprep.subr.bf16.mxu0 0
    %1279 = vmatpush1.bf16.msra.mxu0 0
    %1280 = vmatprep.mubr.bf16.mxu0 0
    %1281 = vmatmul.mubr.bf16.gmra.mrb[0].mxu0 %v1114
    %v1282 = vpop.f32.mrb[0].mxu0
    %v1283 = vadd.f32 %v1234, %v1282
    %v1284 = vpop.f32.mrb[0].mxu0
    %v1285 = vpop.f32.mrb[0].mxu0
    %v1286 = vadd.f32 %v1234, %v1285
    %v1287 = vpop.f32.mrb[0].mxu0
    %1288 = vdwg.mxu0
    %v1289 = vmul.f32 %v1217, %v325
    %v1290 = vmul.f32 %v1220, %v326
    %v1291 = vmul.f32 %v1217, %v327
    %v1292 = vmul.f32 %v1220, %v328
    %v1293 = vmul.f32 %v1217, %v329
    %v1294 = vmul.f32 %v1220, %v330
    %v1295 = vmul.f32 %v1217, %v331
    %v1296 = vmul.f32 %v1220, %v332
    %v1297 = vpack.c.bf16 %v1290, %v1289
    %v1298 = vpack.c.bf16 %v1292, %v1291
    %v1299 = vpack.c.bf16 %v1294, %v1293
    %v1300 = vpack.c.bf16 %v1296, %v1295
    %v1301 = vmul.f32 %v1283, %v325
    %v1302 = vmul.f32 %v1286, %v326
    %v1303 = vmul.f32 %v1283, %v327
    %v1304 = vmul.f32 %v1286, %v328
    %v1305 = vmul.f32 %v1283, %v329
    %v1306 = vmul.f32 %v1286, %v330
    %v1307 = vmul.f32 %v1283, %v331
    %v1308 = vmul.f32 %v1286, %v332
    %v1309 = vpack.c.bf16 %v1302, %v1301
    %v1310 = vpack.c.bf16 %v1304, %v1303
    %v1311 = vpack.c.bf16 %v1306, %v1305
    %v1312 = vpack.c.bf16 %v1308, %v1307
    %v1313 = vpack.c.bf16 %v1154, %v1151
    %v1315 = vsel %vm259, %v1313, 0
    %v1318 = vsel %vm259, %v1297, 0
    %v1321 = vsel %vm259, %v1298, 0
    %v1324 = vsel %vm259, %v1299, 0
    %v1327 = vsel %vm259, %v1300, 0
    %1329 = vmatprep.subr.bf16.mxu0 0
    %1330 = vmatpush1.bf16.xpose.msra.mxu0 %v1318
    %1331 = vmatprep.subr.bf16.mxu0 0
    %1332 = vmatpush1.bf16.xpose.msra.mxu0 %v1321
    %1333 = vmatprep.subr.bf16.mxu0 0
    %1334 = vmatpush1.bf16.xpose.msra.mxu0 %v1324
    %1335 = vmatprep.subr.bf16.mxu0 0
    %1336 = vmatpush1.bf16.xpose.msra.mxu0 %v1327
    %1337 = vmatprep.subr.bf16.mxu0 0
    %1338 = vmatpush1.bf16.xpose.msra.mxu0 0
    %1339 = vmatprep.subr.bf16.mxu0 0
    %1340 = vmatpush1.bf16.xpose.msra.mxu0 0
    %1341 = vmatprep.subr.bf16.mxu0 0
    %1342 = vmatpush1.bf16.xpose.msra.mxu0 0
    %1343 = vmatprep.subr.bf16.mxu0 0
    %1344 = vmatpush1.bf16.xpose.msra.mxu0 0
    %1345 = vmatprep.subr.bf16.mxu0 0
    %1346 = vmatpush1.bf16.xpose.msra.mxu0 0
    %1347 = vmatprep.subr.bf16.mxu0 0
    %1348 = vmatpush1.bf16.xpose.msra.mxu0 0
    %1349 = vmatprep.subr.bf16.mxu0 0
    %1350 = vmatpush1.bf16.xpose.msra.mxu0 0
    %1351 = vmatprep.subr.bf16.mxu0 0
    %1352 = vmatpush1.bf16.xpose.msra.mxu0 0
    %1353 = vmatprep.subr.bf16.mxu0 0
    %1354 = vmatpush1.bf16.xpose.msra.mxu0 0
    %1355 = vmatprep.subr.bf16.mxu0 0
    %1356 = vmatpush1.bf16.xpose.msra.mxu0 0
    %1357 = vmatprep.subr.bf16.mxu0 0
    %1358 = vmatpush1.bf16.xpose.msra.mxu0 0
    %1359 = vmatprep.subr.bf16.mxu0 0
    %1360 = vmatpush1.bf16.xpose.msra.mxu0 0
    %1361 = vmatprep.mubr.bf16.mxu0 0
    %1362 = vmatmul.mubr.bf16.gmra.mrb[0].mxu0 %v1315
    %v1363 = vpop.f32.mrb[0].mxu0
    %v1364 = vadd.f32 %v567, %v1363
    %v1365 = vpop.f32.mrb[0].mxu0
    %v1366 = vpop.f32.mrb[0].mxu0
    %v1367 = vadd.f32 %v567, %v1366
    %v1368 = vpop.f32.mrb[0].mxu0
    %1369 = vdwg.mxu0
    %v1370 = vsel %vm624, %v1364, -inf
    %1371 = vmax.xlane.f32.xlu0 %v1370
    %v1372 = vpop.xlane.xlu0 %1371
    %v1373 = vsel %vm624, %v1367, -inf
    %1374 = vmax.xlane.f32.xlu0 %v1373
    %v1375 = vpop.xlane.xlu0 %1374
    %v1376 = vsub.f32 %v1364, %v1372
    %v1377 = vsub.f32 %v1367, %v1375
    %v1378 = vmul.f32 %v1376, 1.442695
    %v1379 = vpow.pop %v1378
    %v1380 = vmul.f32 %v1377, 1.442695
    %v1381 = vpow.pop %v1380
    %v1382 = vpack.c.bf16 %v1381, %v1379
    %v1384 = vsel %vm624, %v1382, 0
    %1386 = vmatprep.subr.bf16.mxu0 0
    %1387 = vmatpush1.bf16.msra.mxu0 %v654
    %1388 = vmatprep.subr.bf16.mxu0 0
    %1389 = vmatpush1.bf16.msra.mxu0 %v655
    %1390 = vmatprep.subr.bf16.mxu0 0
    %1391 = vmatpush1.bf16.msra.mxu0 %v656
    %1392 = vmatprep.subr.bf16.mxu0 0
    %1393 = vmatpush1.bf16.msra.mxu0 %v657
    %1394 = vmatprep.subr.bf16.mxu0 0
    %1395 = vmatpush1.bf16.msra.mxu0 0
    %1396 = vmatprep.subr.bf16.mxu0 0
    %1397 = vmatpush1.bf16.msra.mxu0 0
    %1398 = vmatprep.subr.bf16.mxu0 0
    %1399 = vmatpush1.bf16.msra.mxu0 0
    %1400 = vmatprep.subr.bf16.mxu0 0
    %1401 = vmatpush1.bf16.msra.mxu0 0
    %1402 = vmatprep.subr.bf16.mxu0 0
    %1403 = vmatpush1.bf16.msra.mxu0 0
    %1404 = vmatprep.subr.bf16.mxu0 0
    %1405 = vmatpush1.bf16.msra.mxu0 0
    %1406 = vmatprep.subr.bf16.mxu0 0
    %1407 = vmatpush1.bf16.msra.mxu0 0
    %1408 = vmatprep.subr.bf16.mxu0 0
    %1409 = vmatpush1.bf16.msra.mxu0 0
    %1410 = vmatprep.subr.bf16.mxu0 0
    %1411 = vmatpush1.bf16.msra.mxu0 0
    %1412 = vmatprep.subr.bf16.mxu0 0
    %1413 = vmatpush1.bf16.msra.mxu0 0
    %1414 = vmatprep.subr.bf16.mxu0 0
    %1415 = vmatpush1.bf16.msra.mxu0 0
    %1416 = vmatprep.subr.bf16.mxu0 0
    %1417 = vmatpush1.bf16.msra.mxu0 0
    %1418 = vmatprep.mubr.bf16.mxu0 0
    %1419 = vmatmul.mubr.bf16.gmra.mrb[0].mxu0 %v1384
    %v1420 = vpop.f32.mrb[0].mxu0
    %v1421 = vadd.f32 0.0, %v1420
    %v1422 = vpop.f32.mrb[0].mxu0
    %v1423 = vpop.f32.mrb[0].mxu0
    %v1424 = vadd.f32 0.0, %v1423
    %v1425 = vpop.f32.mrb[0].mxu0
    %1426 = vdwg.mxu0
    %v1427 = vrcp.pop %v1421
    %v1428 = vrcp.pop %v1424
    %v1429 = vmul.f32 %v1379, %v1427
    %v1430 = vmul.f32 %v1381, %v1428
    %v1431 = vmul.f32 %v1429, %v333
    %v1432 = vmul.f32 %v1430, %v334
    %v1433 = vpack.c.bf16 %v1432, %v1431
    %v1435 = vsel %vm624, %v1433, 0
    %1437 = vmatprep.subr.bf16.mxu0 0
    %1438 = vmatpush1.bf16.msra.mxu0 %v1309
    %1439 = vmatprep.subr.bf16.mxu0 0
    %1440 = vmatpush1.bf16.msra.mxu0 %v1310
    %1441 = vmatprep.subr.bf16.mxu0 0
    %1442 = vmatpush1.bf16.msra.mxu0 %v1311
    %1443 = vmatprep.subr.bf16.mxu0 0
    %1444 = vmatpush1.bf16.msra.mxu0 %v1312
    %1445 = vmatprep.subr.bf16.mxu0 0
    %1446 = vmatpush1.bf16.msra.mxu0 0
    %1447 = vmatprep.subr.bf16.mxu0 0
    %1448 = vmatpush1.bf16.msra.mxu0 0
    %1449 = vmatprep.subr.bf16.mxu0 0
    %1450 = vmatpush1.bf16.msra.mxu0 0
    %1451 = vmatprep.subr.bf16.mxu0 0
    %1452 = vmatpush1.bf16.msra.mxu0 0
    %1453 = vmatprep.subr.bf16.mxu0 0
    %1454 = vmatpush1.bf16.msra.mxu0 0
    %1455 = vmatprep.subr.bf16.mxu0 0
    %1456 = vmatpush1.bf16.msra.mxu0 0
    %1457 = vmatprep.subr.bf16.mxu0 0
    %1458 = vmatpush1.bf16.msra.mxu0 0
    %1459 = vmatprep.subr.bf16.mxu0 0
    %1460 = vmatpush1.bf16.msra.mxu0 0
    %1461 = vmatprep.subr.bf16.mxu0 0
    %1462 = vmatpush1.bf16.msra.mxu0 0
    %1463 = vmatprep.subr.bf16.mxu0 0
    %1464 = vmatpush1.bf16.msra.mxu0 0
    %1465 = vmatprep.subr.bf16.mxu0 0
    %1466 = vmatpush1.bf16.msra.mxu0 0
    %1467 = vmatprep.subr.bf16.mxu0 0
    %1468 = vmatpush1.bf16.msra.mxu0 0
    %1469 = vmatprep.mubr.bf16.mxu0 0
    %1470 = vmatmul.mubr.bf16.gmra.mrb[0].mxu0 %v1435
    %v1471 = vpop.f32.mrb[0].mxu0
    %v1472 = vadd.f32 0.0, %v1471
    %v1473 = vpop.f32.mrb[0].mxu0
    %v1474 = vpop.f32.mrb[0].mxu0
    %v1475 = vadd.f32 0.0, %v1474
    %v1476 = vpop.f32.mrb[0].mxu0
    %1477 = vdwg.mxu0
    %v1478 = vpack.c.bf16 %v1475, %v1472
    %s1479 = scalar_lea.vmem %s15, 16
    %v1480 = vld [vmem:[%s1479] sm:$0xf]
    %v1481 = vld [vmem:[%s1479 + $0x4] sm:$0xf]
    %v1482 = vld [vmem:[%s1479 + $0x8] sm:$0xf]
    %v1483 = vld [vmem:[%s1479 + $0xc] sm:$0xf]
    %s1484 = scalar_lea.vmem %s16, 1
    %v1485 = vld [vmem:[%s1484] sm:$0x1]
    %v1487 = vlaneseq
    %v1488 = vshrl.u32 %v1487, 7
    %v1489 = vsub.s32 0, %v1488
    %v1490 = vrot.slane %v1485, %v1489
    %v1496 = vunpack.c.l.b16 %v1480
    %v1497 = vunpack.c.l.b16 %v1481
    %v1498 = vunpack.c.l.b16 %v1482
    %v1499 = vunpack.c.l.b16 %v1483
    %v1500 = vpack.c.b16 %v1497, %v1496
    %v1501 = vpack.c.b16 %v1499, %v1498
    %v1505 = vsel %vm259, %v1478, 0
    %1507 = vmatprep.subr.bf16.mxu0 0
    %1508 = vmatpush1.bf16.msra.mxu0 %v1500
    %1509 = vmatprep.subr.bf16.mxu0 0
    %1510 = vmatpush1.bf16.msra.mxu0 %v1501
    %1511 = vmatprep.subr.bf16.mxu0 0
    %1512 = vmatpush1.bf16.msra.mxu0 0
    %1513 = vmatprep.subr.bf16.mxu0 0
    %1514 = vmatpush1.bf16.msra.mxu0 0
    %1515 = vmatprep.subr.bf16.mxu0 0
    %1516 = vmatpush1.bf16.msra.mxu0 0
    %1517 = vmatprep.subr.bf16.mxu0 0
    %1518 = vmatpush1.bf16.msra.mxu0 0
    %1519 = vmatprep.subr.bf16.mxu0 0
    %1520 = vmatpush1.bf16.msra.mxu0 0
    %1521 = vmatprep.subr.bf16.mxu0 0
    %1522 = vmatpush1.bf16.msra.mxu0 0
    %1523 = vmatprep.subr.bf16.mxu0 0
    %1524 = vmatpush1.bf16.msra.mxu0 0
    %1525 = vmatprep.subr.bf16.mxu0 0
    %1526 = vmatpush1.bf16.msra.mxu0 0
    %1527 = vmatprep.subr.bf16.mxu0 0
    %1528 = vmatpush1.bf16.msra.mxu0 0
    %1529 = vmatprep.subr.bf16.mxu0 0
    %1530 = vmatpush1.bf16.msra.mxu0 0
    %1531 = vmatprep.subr.bf16.mxu0 0
    %1532 = vmatpush1.bf16.msra.mxu0 0
    %1533 = vmatprep.subr.bf16.mxu0 0
    %1534 = vmatpush1.bf16.msra.mxu0 0
    %1535 = vmatprep.subr.bf16.mxu0 0
    %1536 = vmatpush1.bf16.msra.mxu0 0
    %1537 = vmatprep.subr.bf16.mxu0 0
    %1538 = vmatpush1.bf16.msra.mxu0 0
    %1539 = vmatprep.mubr.bf16.mxu0 0
    %1540 = vmatmul.mubr.bf16.gmra.mrb[0].mxu0 %v1505
    %v1541 = vpop.f32.mrb[0].mxu0
    %v1542 = vadd.f32 %v1490, %v1541
    %v1543 = vpop.f32.mrb[0].mxu0
    %v1544 = vpop.f32.mrb[0].mxu0
    %v1545 = vadd.f32 %v1490, %v1544
    %v1546 = vpop.f32.mrb[0].mxu0
    %1547 = vdwg.mxu0
    %v1548 = vadd.f32 %v1085, %v1542
    %v1549 = vadd.f32 %v1086, %v1545
    %s1550 = scalar_lea.vmem %s17, 1
    %v1551 = vld [vmem:[%s1550] sm:$0x1]
    %s1552 = scalar_lea.vmem %s18, 1
    %v1553 = vld [vmem:[%s1552] sm:$0x1]
    %v1554 = vsel %vm259, %v1548, 0.0
    %1555 = vadd.xlane.f32.xlu0 %v1554
    %v1556 = vpop.xlane.xlu0 %1555
    %v1557 = vsel %vm259, %v1549, 0.0
    %1558 = vadd.xlane.f32.xlu0 %v1557
    %v1559 = vpop.xlane.xlu0 %1558
    %v1560 = vmul.f32 %v1556, %v266
    %v1561 = vmul.f32 %v1559, %v266
    %v1562 = vsub.f32 %v1548, %v1560
    %v1563 = vsub.f32 %v1549, %v1561
    %v1564 = vmul.f32 %v1562, %v1562
    %v1565 = vmul.f32 %v1563, %v1563
    %v1566 = vsel %vm259, %v1564, 0.0
    %1567 = vadd.xlane.f32.xlu0 %v1566
    %v1568 = vpop.xlane.xlu0 %1567
    %v1569 = vsel %vm259, %v1565, 0.0
    %1570 = vadd.xlane.f32.xlu0 %v1569
    %v1571 = vpop.xlane.xlu0 %1570
    %v1572 = vmul.f32 %v1568, %v266
    %v1573 = vmul.f32 %v1571, %v266
    %v1574 = vadd.f32 %v1572, 1e-12
    %v1575 = vadd.f32 %v1573, 1e-12
    %v1576 = vrsqrt.pop %v1574
    %v1577 = vrsqrt.pop %v1575
    %v1578 = vmul.f32 %v1562, %v1576
    %v1579 = vmul.f32 %v1563, %v1577
    %v1581 = vlaneseq
    %v1582 = vshrl.u32 %v1581, 7
    %v1583 = vsub.s32 0, %v1582
    %v1584 = vrot.slane %v1551, %v1583
    %v1586 = vmul.f32 %v1578, %v1584
    %v1587 = vmul.f32 %v1579, %v1584
    %v1589 = vlaneseq
    %v1590 = vshrl.u32 %v1589, 7
    %v1591 = vsub.s32 0, %v1590
    %v1592 = vrot.slane %v1553, %v1591
    %v1594 = vadd.f32 %v1586, %v1592
    %v1595 = vadd.f32 %v1587, %v1592
    %v1596 = vpack.c.bf16 %v1595, %v1594
    %s1597 = scalar_lea.vmem %s19, 16
    %v1598 = vld [vmem:[%s1597] sm:$0xf]
    %v1599 = vld [vmem:[%s1597 + $0x4] sm:$0xf]
    %v1600 = vld [vmem:[%s1597 + $0x8] sm:$0xf]
    %v1601 = vld [vmem:[%s1597 + $0xc] sm:$0xf]
    %s1602 = scalar_lea.vmem %s20, 1
    %v1603 = vld [vmem:[%s1602] sm:$0x1]
    %v1605 = vlaneseq
    %v1606 = vshrl.u32 %v1605, 7
    %v1607 = vsub.s32 0, %v1606
    %v1608 = vrot.slane %v1603, %v1607
    %v1614 = vunpack.c.l.b16 %v1598
    %v1615 = vunpack.c.l.b16 %v1599
    %v1616 = vunpack.c.l.b16 %v1600
    %v1617 = vunpack.c.l.b16 %v1601
    %v1618 = vpack.c.b16 %v1615, %v1614
    %v1619 = vpack.c.b16 %v1617, %v1616
    %v1623 = vsel %vm259, %v1596, 0
    %1625 = vmatprep.subr.bf16.mxu0 0
    %1626 = vmatpush1.bf16.msra.mxu0 %v1618
    %1627 = vmatprep.subr.bf16.mxu0 0
    %1628 = vmatpush1.bf16.msra.mxu0 %v1619
    %1629 = vmatprep.subr.bf16.mxu0 0
    %1630 = vmatpush1.bf16.msra.mxu0 0
    %1631 = vmatprep.subr.bf16.mxu0 0
    %1632 = vmatpush1.bf16.msra.mxu0 0
    %1633 = vmatprep.subr.bf16.mxu0 0
    %1634 = vmatpush1.bf16.msra.mxu0 0
    %1635 = vmatprep.subr.bf16.mxu0 0
    %1636 = vmatpush1.bf16.msra.mxu0 0
    %1637 = vmatprep.subr.bf16.mxu0 0
    %1638 = vmatpush1.bf16.msra.mxu0 0
    %1639 = vmatprep.subr.bf16.mxu0 0
    %1640 = vmatpush1.bf16.msra.mxu0 0
    %1641 = vmatprep.subr.bf16.mxu0 0
    %1642 = vmatpush1.bf16.msra.mxu0 0
    %1643 = vmatprep.subr.bf16.mxu0 0
    %1644 = vmatpush1.bf16.msra.mxu0 0
    %1645 = vmatprep.subr.bf16.mxu0 0
    %1646 = vmatpush1.bf16.msra.mxu0 0
    %1647 = vmatprep.subr.bf16.mxu0 0
    %1648 = vmatpush1.bf16.msra.mxu0 0
    %1649 = vmatprep.subr.bf16.mxu0 0
    %1650 = vmatpush1.bf16.msra.mxu0 0
    %1651 = vmatprep.subr.bf16.mxu0 0
    %1652 = vmatpush1.bf16.msra.mxu0 0
    %1653 = vmatprep.subr.bf16.mxu0 0
    %1654 = vmatpush1.bf16.msra.mxu0 0
    %1655 = vmatprep.subr.bf16.mxu0 0
    %1656 = vmatpush1.bf16.msra.mxu0 0
    %1657 = vmatprep.mubr.bf16.mxu0 0
    %1658 = vmatmul.mubr.bf16.gmra.mrb[0].mxu0 %v1623
    %v1659 = vpop.f32.mrb[0].mxu0
    %v1660 = vadd.f32 %v1608, %v1659
    %v1661 = vpop.f32.mrb[0].mxu0
    %v1662 = vpop.f32.mrb[0].mxu0
    %v1663 = vadd.f32 %v1608, %v1662
    %v1664 = vpop.f32.mrb[0].mxu0
    %1665 = vdwg.mxu0
    %v1666 = vmul.f32 %v1660, 0.5
    %v1667 = vmul.f32 %v1663, 0.5
    %v1668 = vmul.f32 %v1660, 0.044715
    %v1669 = vmul.f32 %v1663, 0.044715
    %v1670 = vmul.f32 %v1668, %v1660
    %v1671 = vmul.f32 %v1669, %v1663
    %v1672 = vmul.f32 %v1670, %v1660
    %v1673 = vmul.f32 %v1671, %v1663
    %v1674 = vadd.f32 %v1660, %v1672
    %v1675 = vadd.f32 %v1663, %v1673
    %v1676 = vmul.f32 %v1674, 0.7978846
    %v1677 = vmul.f32 %v1675, 0.7978846
    %v1678 = vtanh.pop %v1676
    %v1679 = vtanh.pop %v1677
    %v1680 = vadd.f32 %v1678, 1.0
    %v1681 = vadd.f32 %v1679, 1.0
    %v1682 = vmul.f32 %v1666, %v1680
    %v1683 = vmul.f32 %v1667, %v1681
    %v1684 = vpack.c.bf16 %v1683, %v1682
    %s1685 = scalar_lea.vmem %s21, 32
    %v1686 = vld [vmem:[%s1685] sm:$0xf]
    %v1687 = vld [vmem:[%s1685 + $0x4] sm:$0xf]
    %v1688 = vld [vmem:[%s1685 + $0x8] sm:$0xf]
    %v1689 = vld [vmem:[%s1685 + $0xc] sm:$0xf]
    %v1690 = vld [vmem:[%s1685 + $0x10] sm:$0xf]
    %v1691 = vld [vmem:[%s1685 + $0x14] sm:$0xf]
    %v1692 = vld [vmem:[%s1685 + $0x18] sm:$0xf]
    %v1693 = vld [vmem:[%s1685 + $0x1c] sm:$0xf]
    %s1694 = scalar_lea.vmem %s22, 1
    %v1695 = vld [vmem:[%s1694] sm:$0x1]
    %v1697 = vlaneseq
    %v1698 = vshrl.u32 %v1697, 7
    %v1699 = vsub.s32 0, %v1698
    %v1700 = vrot.slane %v1695, %v1699
    %v1710 = vunpack.c.l.b16 %v1686
    %v1711 = vunpack.c.l.b16 %v1687
    %v1712 = vunpack.c.l.b16 %v1688
    %v1713 = vunpack.c.l.b16 %v1689
    %v1714 = vunpack.c.l.b16 %v1690
    %v1715 = vunpack.c.l.b16 %v1691
    %v1716 = vunpack.c.l.b16 %v1692
    %v1717 = vunpack.c.l.b16 %v1693
    %v1718 = vpack.c.b16 %v1711, %v1710
    %v1719 = vpack.c.b16 %v1713, %v1712
    %v1720 = vpack.c.b16 %v1715, %v1714
    %v1721 = vpack.c.b16 %v1717, %v1716
    %v1727 = vsel %vm624, %v1684, 0
    %1729 = vmatprep.subr.bf16.mxu0 0
    %1730 = vmatpush1.bf16.msra.mxu0 %v1718
    %1731 = vmatprep.subr.bf16.mxu0 0
    %1732 = vmatpush1.bf16.msra.mxu0 %v1719
    %1733 = vmatprep.subr.bf16.mxu0 0
    %1734 = vmatpush1.bf16.msra.mxu0 %v1720
    %1735 = vmatprep.subr.bf16.mxu0 0
    %1736 = vmatpush1.bf16.msra.mxu0 %v1721
    %1737 = vmatprep.subr.bf16.mxu0 0
    %1738 = vmatpush1.bf16.msra.mxu0 0
    %1739 = vmatprep.subr.bf16.mxu0 0
    %1740 = vmatpush1.bf16.msra.mxu0 0
    %1741 = vmatprep.subr.bf16.mxu0 0
    %1742 = vmatpush1.bf16.msra.mxu0 0
    %1743 = vmatprep.subr.bf16.mxu0 0
    %1744 = vmatpush1.bf16.msra.mxu0 0
    %1745 = vmatprep.subr.bf16.mxu0 0
    %1746 = vmatpush1.bf16.msra.mxu0 0
    %1747 = vmatprep.subr.bf16.mxu0 0
    %1748 = vmatpush1.bf16.msra.mxu0 0
    %1749 = vmatprep.subr.bf16.mxu0 0
    %1750 = vmatpush1.bf16.msra.mxu0 0
    %1751 = vmatprep.subr.bf16.mxu0 0
    %1752 = vmatpush1.bf16.msra.mxu0 0
    %1753 = vmatprep.subr.bf16.mxu0 0
    %1754 = vmatpush1.bf16.msra.mxu0 0
    %1755 = vmatprep.subr.bf16.mxu0 0
    %1756 = vmatpush1.bf16.msra.mxu0 0
    %1757 = vmatprep.subr.bf16.mxu0 0
    %1758 = vmatpush1.bf16.msra.mxu0 0
    %1759 = vmatprep.subr.bf16.mxu0 0
    %1760 = vmatpush1.bf16.msra.mxu0 0
    %1761 = vmatprep.mubr.bf16.mxu0 0
    %1762 = vmatmul.mubr.bf16.gmra.mrb[0].mxu0 %v1727
    %v1763 = vpop.f32.mrb[0].mxu0
    %v1764 = vadd.f32 %v1700, %v1763
    %v1765 = vpop.f32.mrb[0].mxu0
    %v1766 = vpop.f32.mrb[0].mxu0
    %v1767 = vadd.f32 %v1700, %v1766
    %v1768 = vpop.f32.mrb[0].mxu0
    %1769 = vdwg.mxu0
    %v1770 = vadd.f32 %v1594, %v1764
    %v1771 = vadd.f32 %v1595, %v1767
    %s1772 = scalar_lea.vmem %s23, 1
    %v1773 = vld [vmem:[%s1772] sm:$0x1]
    %s1774 = scalar_lea.vmem %s24, 1
    %v1775 = vld [vmem:[%s1774] sm:$0x1]
    %v1776 = vsel %vm259, %v1770, 0.0
    %1777 = vadd.xlane.f32.xlu0 %v1776
    %v1778 = vpop.xlane.xlu0 %1777
    %v1779 = vsel %vm259, %v1771, 0.0
    %1780 = vadd.xlane.f32.xlu0 %v1779
    %v1781 = vpop.xlane.xlu0 %1780
    %v1782 = vmul.f32 %v1778, %v266
    %v1783 = vmul.f32 %v1781, %v266
    %v1784 = vsub.f32 %v1770, %v1782
    %v1785 = vsub.f32 %v1771, %v1783
    %v1786 = vmul.f32 %v1784, %v1784
    %v1787 = vmul.f32 %v1785, %v1785
    %v1788 = vsel %vm259, %v1786, 0.0
    %1789 = vadd.xlane.f32.xlu0 %v1788
    %v1790 = vpop.xlane.xlu0 %1789
    %v1791 = vsel %vm259, %v1787, 0.0
    %1792 = vadd.xlane.f32.xlu0 %v1791
    %v1793 = vpop.xlane.xlu0 %1792
    %v1794 = vmul.f32 %v1790, %v266
    %v1795 = vmul.f32 %v1793, %v266
    %v1796 = vadd.f32 %v1794, 1e-12
    %v1797 = vadd.f32 %v1795, 1e-12
    %v1798 = vrsqrt.pop %v1796
    %v1799 = vrsqrt.pop %v1797
    %v1800 = vmul.f32 %v1784, %v1798
    %v1801 = vmul.f32 %v1785, %v1799
    %v1803 = vlaneseq
    %v1804 = vshrl.u32 %v1803, 7
    %v1805 = vsub.s32 0, %v1804
    %v1806 = vrot.slane %v1773, %v1805
    %v1808 = vmul.f32 %v1800, %v1806
    %v1809 = vmul.f32 %v1801, %v1806
    %v1811 = vlaneseq
    %v1812 = vshrl.u32 %v1811, 7
    %v1813 = vsub.s32 0, %v1812
    %v1814 = vrot.slane %v1775, %v1813
    %v1816 = vadd.f32 %v1808, %v1814
    %v1817 = vadd.f32 %v1809, %v1814
    %v1818 = vld [vmem:[%s8] sm:$0x1]
    %v1819 = vpack.c.bf16 %v1817, %v1816
    %v1821 = vsel %vm318, %v1818, 0
    %1823 = vmatprep.subr.bf16.mxu0 0
    %1824 = vmatpush1.bf16.msra.mxu0 %v1819
    %1825 = vmatprep.subr.bf16.mxu0 0
    %1826 = vmatpush1.bf16.msra.mxu0 0
    %1827 = vmatprep.subr.bf16.mxu0 0
    %1828 = vmatpush1.bf16.msra.mxu0 0
    %1829 = vmatprep.subr.bf16.mxu0 0
    %1830 = vmatpush1.bf16.msra.mxu0 0
    %1831 = vmatprep.subr.bf16.mxu0 0
    %1832 = vmatpush1.bf16.msra.mxu0 0
    %1833 = vmatprep.subr.bf16.mxu0 0
    %1834 = vmatpush1.bf16.msra.mxu0 0
    %1835 = vmatprep.subr.bf16.mxu0 0
    %1836 = vmatpush1.bf16.msra.mxu0 0
    %1837 = vmatprep.subr.bf16.mxu0 0
    %1838 = vmatpush1.bf16.msra.mxu0 0
    %1839 = vmatprep.subr.bf16.mxu0 0
    %1840 = vmatpush1.bf16.msra.mxu0 0
    %1841 = vmatprep.subr.bf16.mxu0 0
    %1842 = vmatpush1.bf16.msra.mxu0 0
    %1843 = vmatprep.subr.bf16.mxu0 0
    %1844 = vmatpush1.bf16.msra.mxu0 0
    %1845 = vmatprep.subr.bf16.mxu0 0
    %1846 = vmatpush1.bf16.msra.mxu0 0
    %1847 = vmatprep.subr.bf16.mxu0 0
    %1848 = vmatpush1.bf16.msra.mxu0 0
    %1849 = vmatprep.subr.bf16.mxu0 0
    %1850 = vmatpush1.bf16.msra.mxu0 0
    %1851 = vmatprep.subr.bf16.mxu0 0
    %1852 = vmatpush1.bf16.msra.mxu0 0
    %1853 = vmatprep.subr.bf16.mxu0 0
    %1854 = vmatpush1.bf16.msra.mxu0 0
    %1855 = vmatprep.mubr.bf16.mxu0 0
    %1856 = vmatmul.mubr.bf16.gmra.mrb[0].mxu0 %v1821
    %v1857 = vpop.f32.mrb[0].mxu0
    %v1858 = vadd.f32 0.0, %v1857
    %v1859 = vpop.f32.mrb[0].mxu0
    %v1860 = vpop.f32.mrb[0].mxu0
    %v1861 = vpop.f32.mrb[0].mxu0
    %1862 = vdwg.mxu0
    %v1863 = vpack.c.bf16 %v1858, %v1858
    %v1864 = vld [vmem:[%s25] sm:$0xf]
    %v1865 = vld [vmem:[%s25 + $0x4] sm:$0xf]
    %v1866 = vld [vmem:[%s25 + $0x8] sm:$0xf]
    %v1867 = vld [vmem:[%s25 + $0xc] sm:$0xf]
    %v1868 = vld [vmem:[%s26] sm:$0x1]
    %v1870 = vlaneseq
    %v1871 = vshrl.u32 %v1870, 7
    %v1872 = vsub.s32 0, %v1871
    %v1873 = vrot.slane %v1868, %v1872
    %v1879 = vunpack.c.l.b16 %v1864
    %v1880 = vunpack.c.l.b16 %v1865
    %v1881 = vunpack.c.l.b16 %v1866
    %v1882 = vunpack.c.l.b16 %v1867
    %v1883 = vpack.c.b16 %v1880, %v1879
    %v1884 = vpack.c.b16 %v1882, %v1881
    %v1888 = vsel %vm259, %v1863, 0
    %1890 = vmatprep.subr.bf16.mxu0 0
    %1891 = vmatpush1.bf16.msra.mxu0 %v1883
    %1892 = vmatprep.subr.bf16.mxu0 0
    %1893 = vmatpush1.bf16.msra.mxu0 %v1884
    %1894 = vmatprep.subr.bf16.mxu0 0
    %1895 = vmatpush1.bf16.msra.mxu0 0
    %1896 = vmatprep.subr.bf16.mxu0 0
    %1897 = vmatpush1.bf16.msra.mxu0 0
    %1898 = vmatprep.subr.bf16.mxu0 0
    %1899 = vmatpush1.bf16.msra.mxu0 0
    %1900 = vmatprep.subr.bf16.mxu0 0
    %1901 = vmatpush1.bf16.msra.mxu0 0
    %1902 = vmatprep.subr.bf16.mxu0 0
    %1903 = vmatpush1.bf16.msra.mxu0 0
    %1904 = vmatprep.subr.bf16.mxu0 0
    %1905 = vmatpush1.bf16.msra.mxu0 0
    %1906 = vmatprep.subr.bf16.mxu0 0
    %1907 = vmatpush1.bf16.msra.mxu0 0
    %1908 = vmatprep.subr.bf16.mxu0 0
    %1909 = vmatpush1.bf16.msra.mxu0 0
    %1910 = vmatprep.subr.bf16.mxu0 0
    %1911 = vmatpush1.bf16.msra.mxu0 0
    %1912 = vmatprep.subr.bf16.mxu0 0
    %1913 = vmatpush1.bf16.msra.mxu0 0
    %1914 = vmatprep.subr.bf16.mxu0 0
    %1915 = vmatpush1.bf16.msra.mxu0 0
    %1916 = vmatprep.subr.bf16.mxu0 0
    %1917 = vmatpush1.bf16.msra.mxu0 0
    %1918 = vmatprep.subr.bf16.mxu0 0
    %1919 = vmatpush1.bf16.msra.mxu0 0
    %1920 = vmatprep.subr.bf16.mxu0 0
    %1921 = vmatpush1.bf16.msra.mxu0 0
    %1922 = vmatprep.mubr.bf16.mxu0 0
    %1923 = vmatmul.mubr.bf16.gmra.mrb[0].mxu0 %v1888
    %v1924 = vpop.f32.mrb[0].mxu0
    %v1925 = vadd.f32 %v1873, %v1924
    %v1926 = vpop.f32.mrb[0].mxu0
    %v1927 = vpop.f32.mrb[0].mxu0
    %v1928 = vpop.f32.mrb[0].mxu0
    %1929 = vdwg.mxu0
    %v1930 = vsub.f32 0.0, %v1925
    %v1931 = vmul.f32 %v1930, 1.442695
    %v1932 = vpow.pop %v1931
    %v1933 = vadd.f32 %v1932, 1.0
    %v1934 = vrcp.pop %v1933
    %1935 = vst [vmem:[#allocation8] sm:$0x3] %v1934
    // Predicated region
    $region122: #{tpu_custom_call.1} parent=1 // pred_check
      _
    $region123: #{tpu_custom_call.1} parent=1 // pred_check_branch
      %1937 = sbr.rel (0) target = $region125
    $region124: #{tpu_custom_call.1} parent=1 // pred_region
      %s1939 = ssub.s32 32, 32
      %1940 = vsyncadd [#allocation4], %s1939
      %s1942 = sshll.u32 [#allocation8], 4
      %s1943 = int_to_ptr.vmem [resolvable:$true] %s1942
      %1945 = dma.vmem_to_hbm [thread:$0]  %s1943, 32, %s27, [#allocation4]
    $region125: #{tpu_custom_call.1} parent=1 // pred_fallthru
      _
    // Predicated region
    $region126: #{tpu_custom_call.1} parent=1 // pred_check
      _
    $region127: #{tpu_custom_call.1} parent=1 // pred_check_branch
      %1947 = sbr.rel (0) target = $region129
    $region128: #{tpu_custom_call.1} parent=1 // pred_region
      %1948 = dma.done [#allocation4], 32
    $region129: #{tpu_custom_call.1} parent=1 // pred_fallthru
      _
    %1949 = vsyncpa [#allocation3], 1
    %1950 = vsyncpa [#allocation6], 1
    %1951 = vsyncpa [#allocation4], 1

</llo_original>
